<compile_context>
chip_gen: v7x
topology: tpu7x:2x2x1
jax: 0.10.0
libtpu: 0.0.40
codegen_flags: <defaults>
</compile_context>

<pallas_src>
import jax
import jax.numpy as jnp
from jax.experimental import pallas as pl
from jax.experimental.pallas import tpu as pltpu


_VMEM_LIMIT_BYTES = 48 * 1024 * 1024        # safe on v7x (64 MiB physical VMEM)
_FUSED_VMEM_BUDGET = 20 * 1024 * 1024       # per-sample resident-working-set cap


# ---------------------------------------------------------------------------
# In-kernel helpers
# ---------------------------------------------------------------------------
def _sigmoid(z):
    # exp goes to the EUP; approx reciprocal also rides the EUP slot,
    # freeing the VALU divide (review feedback, matters most on v5e).
    return pl.reciprocal(1.0 + jnp.exp(-z), approx=True)


def _global_gate(sum_vec, g1_ref, g2_ref):
    """Global-branch bottleneck MLP on the per-sample spatial SUM (packed lanes).

    1/P and the pack-fold/broadcast are folded into the packed weights, so this
    returns the packed (1, CP) gate directly.  Weights carry their bias as the
    last row.  The pooled vector is broadcast to 8 sublanes so the MXU sees a
    well-formed (8, K) x (K, N) matmul."""
    k1 = g1_ref.shape[0] - 1
    k2 = g2_ref.shape[0] - 1
    s8 = jnp.broadcast_to(sum_vec, (8, sum_vec.shape[-1]))
    h = jnp.dot(s8, g1_ref[0:k1, :],
                preferred_element_type=jnp.float32) + g1_ref[k1:k1 + 1, :]
    h = jnp.maximum(h, 0.0)
    g = jnp.dot(h, g2_ref[0:k2, :],
                preferred_element_type=jnp.float32) + g2_ref[k2:k2 + 1, :]
    return g[0:1, :]


def _local_blend(x, r, feat, g, a1_ref, a2_ref):
    """sigmoid(localMLP(feat) + g) gate between x and r (packed-pixel layout)."""
    k1 = a1_ref.shape[0] - 1
    k2 = a2_ref.shape[0] - 1
    h = jnp.dot(feat, a1_ref[0:k1, :],
                preferred_element_type=jnp.float32) + a1_ref[k1:k1 + 1, :]
    h = jnp.maximum(h, 0.0)
    logits = jnp.dot(h, a2_ref[0:k2, :],
                     preferred_element_type=jnp.float32) + a2_ref[k2:k2 + 1, :]
    wei = _sigmoid(logits + g)
    return r + wei * (x - r)            # == x * wei + r * (1 - wei)


# ---------------------------------------------------------------------------
# Fused single-pass kernel (sample resident in VMEM), grid = (N,)
# ---------------------------------------------------------------------------
def _iaff_fused_kernel(x_ref, r_ref, a1a_ref, a2a_ref, a1b_ref, a2b_ref,
                       g1w_ref, g2w_ref, out_ref):
    x = x_ref[0]
    r = r_ref[0]
    xa = x + r
    g1 = _global_gate(jnp.sum(xa, axis=0, keepdims=True), g1w_ref, g2w_ref)
    xi = _local_blend(x, r, xa, g1, a1a_ref, a2a_ref)
    # PyTorch forward reuses self.global_att for stage 2 (global_att2 unused).
    g2 = _global_gate(jnp.sum(xi, axis=0, keepdims=True), g1w_ref, g2w_ref)
    xo = _local_blend(x, r, xi, g2, a1b_ref, a2b_ref)
    out_ref[0] = xo.astype(out_ref.dtype)


# ---------------------------------------------------------------------------
# Tiled fallback kernels (samples too large for VMEM residency)
# ---------------------------------------------------------------------------
def _gate1_kernel(x_ref, r_ref, g1w_ref, g2w_ref, gout_ref, acc_ref):
    """Accumulate per-sample spatial sum of xa = x + r; at the last row tile
    run the global MLP in-kernel and emit the packed gate vector g1p."""
    t = pl.program_id(1)

    @pl.when(t == 0)
    def _init():
        acc_ref[...] = jnp.zeros_like(acc_ref)

    acc_ref[...] += jnp.sum(x_ref[0] + r_ref[0], axis=0, keepdims=True)

    @pl.when(t == pl.num_programs(1) - 1)
    def _finish():
        gout_ref[0] = _global_gate(acc_ref[...], g1w_ref, g2w_ref)


def _gate2_kernel(x_ref, r_ref, g1p_ref, a1_ref, a2_ref, g1w_ref, g2w_ref,
                  gout_ref, acc_ref):
    """Recompute stage-1 blend xi per tile, accumulate its sum, emit g2p."""
    t = pl.program_id(1)

    @pl.when(t == 0)
    def _init():
        acc_ref[...] = jnp.zeros_like(acc_ref)

    x = x_ref[0]
    r = r_ref[0]
    xi = _local_blend(x, r, x + r, g1p_ref[0], a1_ref, a2_ref)
    acc_ref[...] += jnp.sum(xi, axis=0, keepdims=True)

    @pl.when(t == pl.num_programs(1) - 1)
    def _finish():
        gout_ref[0] = _global_gate(acc_ref[...], g1w_ref, g2w_ref)


def _out_kernel(x_ref, r_ref, g1p_ref, g2p_ref, a1a_ref, a2a_ref,
                a1b_ref, a2b_ref, out_ref):
    """Recompute stage-1 blend, apply stage-2 gate, write the output tile."""
    x = x_ref[0]
    r = r_ref[0]
    xi = _local_blend(x, r, x + r, g1p_ref[0], a1a_ref, a2a_ref)
    xo = _local_blend(x, r, xi, g2p_ref[0], a1b_ref, a2b_ref)
    out_ref[0] = xo.astype(out_ref.dtype)


# ---------------------------------------------------------------------------
# Trace-time weight preparation (BN folding, pixel packing, bias packing)
# ---------------------------------------------------------------------------
def _fold_conv_bn(w, b, bn, eps=1e-5):
    """Fold inference-mode BatchNorm into a 1x1-conv (matmul) weight / bias."""
    gamma, beta, mean, var = bn
    s = gamma / jnp.sqrt(var + eps)
    return w * s[None, :], b * s + (beta - mean * s)


def _pack_local_branch(p, pack):
    """Block-diagonal (pixel-packed) local-branch weights; bias as last row."""
    w1, b1 = _fold_conv_bn(p["w1"], p["b1"], p["bn1"])
    w2, b2 = _fold_conv_bn(p["w2"], p["b2"], p["bn2"])
    eye = jnp.eye(pack, dtype=jnp.float32)
    w1p = jnp.kron(eye, w1)                               # (CP, pack*IC)
    w2p = jnp.kron(eye, w2)                               # (pack*IC, CP)
    b1p = jnp.tile(b1, pack)
    b2p = jnp.tile(b2, pack)
    a1 = jnp.concatenate([w1p, b1p[None, :]], axis=0).astype(jnp.float32)
    a2 = jnp.concatenate([w2p, b2p[None, :]], axis=0).astype(jnp.float32)
    return a1, a2


def _pack_global_branch(p, pack, inv_p):
    """Global-branch weights in packed-lane space: 1/P fold + pack-fold on the
    input side, pack-broadcast on the output side; bias as last row."""
    w1, b1 = _fold_conv_bn(p["w1"], p["b1"], p["bn1"])
    w2, b2 = _fold_conv_bn(p["w2"], p["b2"], p["bn2"])
    w1p = jnp.tile(w1, (pack, 1)) * inv_p                 # (CP, IC)
    w2p = jnp.tile(w2, (1, pack))                         # (IC, CP)
    b2p = jnp.tile(b2, pack)
    g1 = jnp.concatenate([w1p, b1[None, :]], axis=0).astype(jnp.float32)
    g2 = jnp.concatenate([w2p, b2p[None, :]], axis=0).astype(jnp.float32)
    return g1, g2


def _round_up(v, m):
    return (v + m - 1) // m * m


# ---------------------------------------------------------------------------
# Wrapper
# ---------------------------------------------------------------------------
def iaff_forward(x_nhwc, res_nhwc, params, *, fuse_vmem_budget=_FUSED_VMEM_BUDGET):
    N, H, W, C = x_nhwc.shape
    P = H * W

    # Lane-dense pixel packing (pack consecutive pixels into one 128-lane row).
    pack = 128 // C if (C <= 128 and 128 % C == 0) else 1
    if P % pack != 0:
        pack = 1                      # robust fallback for odd H*W
    PR = P // pack
    CP = pack * C

    a1a, a2a = _pack_local_branch(params["local"], pack)
    a1b, a2b = _pack_local_branch(params["local2"], pack)
    g1w, g2w = _pack_global_branch(params["global"], pack, 1.0 / float(P))

    xp = x_nhwc.reshape(N, PR, CP)
    rp = res_nhwc.reshape(N, PR, CP)

    def wspec(a, nargs):
        if nargs == 1:
            return pl.BlockSpec(a.shape, lambda n: (0, 0))
        return pl.BlockSpec(a.shape, lambda i, j: (0, 0))

    # ---- fused single-pass path: whole sample resident in VMEM -------------
    # Rough per-sample VMEM estimate: x/r/out double-buffered (6 blocks) plus
    # in-kernel temporaries (~8 blocks) of PR*CP f32.
    est_fused = 14 * PR * CP * 4
    if est_fused <= fuse_vmem_budget:
        row_spec = pl.BlockSpec((1, PR, CP), lambda n: (n, 0, 0))
        out = pl.pallas_call(
            _iaff_fused_kernel,
            out_shape=jax.ShapeDtypeStruct((N, PR, CP), x_nhwc.dtype),
            grid_spec=pltpu.PrefetchScalarGridSpec(
                num_scalar_prefetch=0, grid=(N,),
                in_specs=[row_spec, row_spec,
                          wspec(a1a, 1), wspec(a2a, 1),
                          wspec(a1b, 1), wspec(a2b, 1),
                          wspec(g1w, 1), wspec(g2w, 1)],
                out_specs=row_spec),
            compiler_params=pltpu.CompilerParams(
                dimension_semantics=("parallel",),
                vmem_limit_bytes=_VMEM_LIMIT_BYTES),
        )(xp, rp, a1a, a2a, a1b, a2b, g1w, g2w)
        return out.reshape(N, H, W, C)

    # ---- tiled 3-pass fallback ----------------------------------------------
    TM = min(1024, _round_up(PR, 8))
    PR_pad = _round_up(PR, TM)
    if PR_pad != PR:
        # Zero rows: contribute 0 to the pooled sums and blend to 0 -> sliced off.
        padcfg = ((0, 0), (0, PR_pad - PR), (0, 0))
        xp = jnp.pad(xp, padcfg)
        rp = jnp.pad(rp, padcfg)
    n_tiles = PR_pad // TM

    cparams_red = pltpu.CompilerParams(
        dimension_semantics=("parallel", "arbitrary"),
        vmem_limit_bytes=_VMEM_LIMIT_BYTES)
    cparams_par = pltpu.CompilerParams(
        dimension_semantics=("parallel", "parallel"),
        vmem_limit_bytes=_VMEM_LIMIT_BYTES)

    row_nt = pl.BlockSpec((1, TM, CP), lambda n, t: (n, t, 0))
    vec_nt = pl.BlockSpec((1, 1, CP), lambda n, t: (n, 0, 0))
    gvec_shape = jax.ShapeDtypeStruct((N, 1, CP), jnp.float32)

    # Pass 1: pooled sum of xa -> global MLP in-kernel -> packed gate g1p.
    g1p = pl.pallas_call(
        _gate1_kernel,
        out_shape=gvec_shape,
        grid_spec=pltpu.PrefetchScalarGridSpec(
            num_scalar_prefetch=0, grid=(N, n_tiles),
            in_specs=[row_nt, row_nt, wspec(g1w, 2), wspec(g2w, 2)],
            out_specs=vec_nt,
            scratch_shapes=[pltpu.VMEM((1, CP), jnp.float32)]),
        compiler_params=cparams_red,
    )(xp, rp, g1w, g2w)

    # Pass 2: recompute xi per tile, pooled sum -> packed gate g2p.
    g2p = pl.pallas_call(
        _gate2_kernel,
        out_shape=gvec_shape,
        grid_spec=pltpu.PrefetchScalarGridSpec(
            num_scalar_prefetch=0, grid=(N, n_tiles),
            in_specs=[row_nt, row_nt, vec_nt,
                      wspec(a1a, 2), wspec(a2a, 2),
                      wspec(g1w, 2), wspec(g2w, 2)],
            out_specs=vec_nt,
            scratch_shapes=[pltpu.VMEM((1, CP), jnp.float32)]),
        compiler_params=cparams_red,
    )(xp, rp, g1p, a1a, a2a, g1w, g2w)

    # Pass 3: recompute xi, stage-2 blend, write output.
    # Row-tile axis leads so both v7x TensorCores get work even when N == 1.
    row_tn = pl.BlockSpec((1, TM, CP), lambda t, n: (n, t, 0))
    vec_tn = pl.BlockSpec((1, 1, CP), lambda t, n: (n, 0, 0))
    xo = pl.pallas_call(
        _out_kernel,
        out_shape=jax.ShapeDtypeStruct((N, PR_pad, CP), x_nhwc.dtype),
        grid_spec=pltpu.PrefetchScalarGridSpec(
            num_scalar_prefetch=0, grid=(n_tiles, N),
            in_specs=[row_tn, row_tn, vec_tn, vec_tn,
                      wspec(a1a, 2), wspec(a2a, 2),
                      wspec(a1b, 2), wspec(a2b, 2)],
            out_specs=row_tn),
        compiler_params=cparams_par,
    )(xp, rp, g1p, g2p, a1a, a2a, a1b, a2b)

    if PR_pad != PR:
        xo = xo[:, :PR, :]
    return xo.reshape(N, H, W, C)


# ---------------------------------------------------------------------------
# Pure-JAX f32 reference (NHWC)
# ---------------------------------------------------------------------------
def _iaff_ref(x, res, params):
    def local(p, feat):
        w1, b1 = _fold_conv_bn(p["w1"], p["b1"], p["bn1"])
        w2, b2 = _fold_conv_bn(p["w2"], p["b2"], p["bn2"])
        h = jnp.maximum(jnp.einsum("nhwc,cd->nhwd", feat, w1) + b1, 0.0)
        return jnp.einsum("nhwd,dc->nhwc", h, w2) + b2

    def glob(p, feat):
        w1, b1 = _fold_conv_bn(p["w1"], p["b1"], p["bn1"])
        w2, b2 = _fold_conv_bn(p["w2"], p["b2"], p["bn2"])
        pooled = jnp.mean(feat, axis=(1, 2))
        h = jnp.maximum(pooled @ w1 + b1, 0.0)
        return (h @ w2 + b2)[:, None, None, :]

    xa = x + res
    wei = jax.nn.sigmoid(local(params["local"], xa) + glob(params["global"], xa))
    xi = x * wei + res * (1.0 - wei)
    wei2 = jax.nn.sigmoid(local(params["local2"], xi) + glob(params["global"], xi))
    return x * wei2 + res * (1.0 - wei2)


# ---------------------------------------------------------------------------
# Main
# ---------------------------------------------------------------------------
def _make_branch_params(key, c, ic):
    ks = jax.random.split(key, 6)
    w1 = 0.3 * jax.random.normal(ks[0], (c, ic), jnp.float32) / (c ** 0.5)
    b1 = 0.1 * jax.random.normal(ks[1], (ic,), jnp.float32)
    w2 = 0.3 * jax.random.normal(ks[2], (ic, c), jnp.float32) / (ic ** 0.5)
    b2 = 0.1 * jax.random.normal(ks[3], (c,), jnp.float32)

    def bn(k, n):
        k1, k2, k3, k4 = jax.random.split(k, 4)
        gamma = jax.random.uniform(k1, (n,), jnp.float32, 0.5, 1.5)
        beta = 0.1 * jax.random.normal(k2, (n,), jnp.float32)
        mean = 0.1 * jax.random.normal(k3, (n,), jnp.float32)
        var = jax.random.uniform(k4, (n,), jnp.float32, 0.5, 1.5)
        return (gamma, beta, mean, var)

    return dict(w1=w1, b1=b1, bn1=bn(ks[4], ic), w2=w2, b2=b2, bn2=bn(ks[5], c))


if __name__ == "__main__":
    key = jax.random.PRNGKey(0)
    N, C, H, W = 2, 64, 16, 16        # iAFF defaults: channels=64, r=4
    r = 4
    ic = C // r

    ks = jax.random.split(key, 8)
    # PyTorch tensors are NCHW; kernels and reference work in NHWC.
    x_nchw = jax.random.normal(ks[0], (N, C, H, W), jnp.float32)
    res_nchw = jax.random.normal(ks[1], (N, C, H, W), jnp.float32)
    x = jnp.transpose(x_nchw, (0, 2, 3, 1))
    res = jnp.transpose(res_nchw, (0, 2, 3, 1))

    params = {
        "local": _make_branch_params(ks[2], C, ic),
        "global": _make_branch_params(ks[3], C, ic),
        "local2": _make_branch_params(ks[4], C, ic),
        # global_att2 exists in the PyTorch module but is unused by forward().
    }

    # Default path (fused single kernel at this size).
    out_fused = jax.block_until_ready(jax.jit(iaff_forward)(x, res, params))
    # Also exercise the tiled fallback path (forced by a zero fuse budget).
    out_tiled = jax.block_until_ready(
        jax.jit(lambda a, b, p: iaff_forward(a, b, p, fuse_vmem_budget=0))(
            x, res, params))

    ref = jax.block_until_ready(_iaff_ref(x, res, params))
    for name, out in (("fused", out_fused), ("tiled", out_tiled)):
        assert out.shape == (N, H, W, C)
        max_err = float(jnp.max(jnp.abs(out - ref)))
        mean_err = float(jnp.mean(jnp.abs(out - ref)))
        assert max_err < 5e-2 and mean_err < 5e-3, (
            f"{name} mismatch vs reference: max {max_err:.4g}, mean {mean_err:.4g}")

    print("KERNEL_OK")
</pallas_src>

<mosaic_0001>
module attributes {stable_mosaic.version = 11 : i64} {
  func.func @_iaff_fused_kernel(%arg0: i32, %arg1: memref<1x128x128xf32, #tpu.memory_space<vmem>>, %arg2: memref<1x128x128xf32, #tpu.memory_space<vmem>>, %arg3: memref<129x32xf32, #tpu.memory_space<vmem>>, %arg4: memref<33x128xf32, #tpu.memory_space<vmem>>, %arg5: memref<129x32xf32, #tpu.memory_space<vmem>>, %arg6: memref<33x128xf32, #tpu.memory_space<vmem>>, %arg7: memref<129x16xf32, #tpu.memory_space<vmem>>, %arg8: memref<17x128xf32, #tpu.memory_space<vmem>>, %arg9: memref<1x128x128xf32, #tpu.memory_space<vmem>>) attributes {dimension_semantics = [#tpu.dimension_semantics<parallel>], iteration_bounds = array<i64: 2>, scalar_prefetch = 0 : i64, scratch_operands = 0 : i64, tpu.core_type = #tpu.core_type<tc>, window_params = [{transform_indices = @transform_0, window_bounds = array<i64: 1, 128, 128>}, {transform_indices = @transform_1, window_bounds = array<i64: 1, 128, 128>}, {pipeline_mode = #tpu.pipeline_mode<synchronous>, transform_indices = @transform_2, window_bounds = array<i64: 129, 32>}, {pipeline_mode = #tpu.pipeline_mode<synchronous>, transform_indices = @transform_3, window_bounds = array<i64: 33, 128>}, {pipeline_mode = #tpu.pipeline_mode<synchronous>, transform_indices = @transform_4, window_bounds = array<i64: 129, 32>}, {pipeline_mode = #tpu.pipeline_mode<synchronous>, transform_indices = @transform_5, window_bounds = array<i64: 33, 128>}, {pipeline_mode = #tpu.pipeline_mode<synchronous>, transform_indices = @transform_6, window_bounds = array<i64: 129, 16>}, {pipeline_mode = #tpu.pipeline_mode<synchronous>, transform_indices = @transform_7, window_bounds = array<i64: 17, 128>}, {transform_indices = @transform_8, window_bounds = array<i64: 1, 128, 128>}]} {
    %c0 = arith.constant 0 : index
    %c0_0 = arith.constant 0 : index
    %c0_1 = arith.constant 0 : index
    %0 = vector.load %arg1[%c0, %c0_0, %c0_1] : memref<1x128x128xf32, #tpu.memory_space<vmem>>, vector<1x128x128xf32>
    %1 = vector.shape_cast %0 : vector<1x128x128xf32> to vector<128x128xf32>
    %c0_2 = arith.constant 0 : index
    %c0_3 = arith.constant 0 : index
    %c0_4 = arith.constant 0 : index
    %2 = vector.load %arg2[%c0_2, %c0_3, %c0_4] : memref<1x128x128xf32, #tpu.memory_space<vmem>>, vector<1x128x128xf32>
    %3 = vector.shape_cast %2 : vector<1x128x128xf32> to vector<128x128xf32>
    %4 = arith.addf %1, %3 : vector<128x128xf32>
    %cst = arith.constant dense<0.000000e+00> : vector<128xf32>
    %5 = vector.multi_reduction <add>, %4, %cst [0] : vector<128x128xf32> to vector<128xf32>
    %6 = vector.shape_cast %5 : vector<128xf32> to vector<1x128xf32>
    %7 = vector.shape_cast %6 : vector<1x128xf32> to vector<1x128xf32>
    %8 = vector.broadcast %7 : vector<1x128xf32> to vector<8x128xf32>
    %c0_5 = arith.constant 0 : index
    %c0_6 = arith.constant 0 : index
    %9 = vector.load %arg7[%c0_5, %c0_6] : memref<129x16xf32, #tpu.memory_space<vmem>>, vector<128x16xf32>
    %cst_7 = arith.constant dense<0.000000e+00> : vector<8x16xf32>
    %10 = tpu.matmul %8, %9, %cst_7 {dimension_numbers = #tpu.dot_dimension_numbers<[1], [0], [0], [1], [0, 0, 1, 1], [], []>} : vector<8x128xf32>, vector<128x16xf32>, vector<8x16xf32> -> vector<8x16xf32>
    %c128 = arith.constant 128 : index
    %c0_8 = arith.constant 0 : index
    %11 = vector.load %arg7[%c128, %c0_8] : memref<129x16xf32, #tpu.memory_space<vmem>>, vector<1x16xf32>
    %12 = vector.broadcast %11 : vector<1x16xf32> to vector<8x16xf32>
    %13 = arith.addf %10, %12 : vector<8x16xf32>
    %cst_9 = arith.constant 0.000000e+00 : f32
    %14 = vector.broadcast %cst_9 : f32 to vector<8x16xf32>
    %15 = arith.maximumf %13, %14 : vector<8x16xf32>
    %c0_10 = arith.constant 0 : index
    %c0_11 = arith.constant 0 : index
    %16 = vector.load %arg8[%c0_10, %c0_11] : memref<17x128xf32, #tpu.memory_space<vmem>>, vector<16x128xf32>
    %cst_12 = arith.constant dense<0.000000e+00> : vector<8x128xf32>
    %17 = tpu.matmul %15, %16, %cst_12 {dimension_numbers = #tpu.dot_dimension_numbers<[1], [0], [0], [1], [0, 0, 1, 1], [], []>} : vector<8x16xf32>, vector<16x128xf32>, vector<8x128xf32> -> vector<8x128xf32>
    %c16 = arith.constant 16 : index
    %c0_13 = arith.constant 0 : index
    %18 = vector.load %arg8[%c16, %c0_13] : memref<17x128xf32, #tpu.memory_space<vmem>>, vector<1x128xf32>
    %19 = vector.broadcast %18 : vector<1x128xf32> to vector<8x128xf32>
    %20 = arith.addf %17, %19 : vector<8x128xf32>
    %21 = vector.extract_strided_slice %20 {offsets = [0, 0], sizes = [1, 128], strides = [1, 1]} : vector<8x128xf32> to vector<1x128xf32>
    %c0_14 = arith.constant 0 : index
    %c0_15 = arith.constant 0 : index
    %22 = vector.load %arg3[%c0_14, %c0_15] : memref<129x32xf32, #tpu.memory_space<vmem>>, vector<128x32xf32>
    %cst_16 = arith.constant dense<0.000000e+00> : vector<128x32xf32>
    %23 = tpu.matmul %4, %22, %cst_16 {dimension_numbers = #tpu.dot_dimension_numbers<[1], [0], [0], [1], [0, 0, 1, 1], [], []>} : vector<128x128xf32>, vector<128x32xf32>, vector<128x32xf32> -> vector<128x32xf32>
    %c128_17 = arith.constant 128 : index
    %c0_18 = arith.constant 0 : index
    %24 = vector.load %arg3[%c128_17, %c0_18] : memref<129x32xf32, #tpu.memory_space<vmem>>, vector<1x32xf32>
    %25 = vector.broadcast %24 : vector<1x32xf32> to vector<128x32xf32>
    %26 = arith.addf %23, %25 : vector<128x32xf32>
    %cst_19 = arith.constant 0.000000e+00 : f32
    %27 = vector.broadcast %cst_19 : f32 to vector<128x32xf32>
    %28 = arith.maximumf %26, %27 : vector<128x32xf32>
    %c0_20 = arith.constant 0 : index
    %c0_21 = arith.constant 0 : index
    %29 = vector.load %arg4[%c0_20, %c0_21] : memref<33x128xf32, #tpu.memory_space<vmem>>, vector<32x128xf32>
    %cst_22 = arith.constant dense<0.000000e+00> : vector<128x128xf32>
    %30 = tpu.matmul %28, %29, %cst_22 {dimension_numbers = #tpu.dot_dimension_numbers<[1], [0], [0], [1], [0, 0, 1, 1], [], []>} : vector<128x32xf32>, vector<32x128xf32>, vector<128x128xf32> -> vector<128x128xf32>
    %c32 = arith.constant 32 : index
    %c0_23 = arith.constant 0 : index
    %31 = vector.load %arg4[%c32, %c0_23] : memref<33x128xf32, #tpu.memory_space<vmem>>, vector<1x128xf32>
    %32 = vector.broadcast %31 : vector<1x128xf32> to vector<128x128xf32>
    %33 = arith.addf %30, %32 : vector<128x128xf32>
    %34 = vector.broadcast %21 : vector<1x128xf32> to vector<128x128xf32>
    %35 = arith.addf %33, %34 : vector<128x128xf32>
    %cst_24 = arith.constant 0.000000e+00 : f32
    %36 = vector.broadcast %cst_24 : f32 to vector<128x128xf32>
    %37 = arith.subf %36, %35 : vector<128x128xf32>
    %38 = math.exp %37 : vector<128x128xf32>
    %cst_25 = arith.constant 1.000000e+00 : f32
    %39 = vector.broadcast %cst_25 : f32 to vector<128x128xf32>
    %40 = arith.addf %39, %38 : vector<128x128xf32>
    %41 = tpu.reciprocal %40 {approx = true} : vector<128x128xf32> -> vector<128x128xf32>
    %42 = arith.subf %1, %3 : vector<128x128xf32>
    %43 = arith.mulf %41, %42 : vector<128x128xf32>
    %44 = arith.addf %3, %43 : vector<128x128xf32>
    %cst_26 = arith.constant dense<0.000000e+00> : vector<128xf32>
    %45 = vector.multi_reduction <add>, %44, %cst_26 [0] : vector<128x128xf32> to vector<128xf32>
    %46 = vector.shape_cast %45 : vector<128xf32> to vector<1x128xf32>
    %47 = vector.shape_cast %46 : vector<1x128xf32> to vector<1x128xf32>
    %48 = vector.broadcast %47 : vector<1x128xf32> to vector<8x128xf32>
    %c0_27 = arith.constant 0 : index
    %c0_28 = arith.constant 0 : index
    %49 = vector.load %arg7[%c0_27, %c0_28] : memref<129x16xf32, #tpu.memory_space<vmem>>, vector<128x16xf32>
    %cst_29 = arith.constant dense<0.000000e+00> : vector<8x16xf32>
    %50 = tpu.matmul %48, %49, %cst_29 {dimension_numbers = #tpu.dot_dimension_numbers<[1], [0], [0], [1], [0, 0, 1, 1], [], []>} : vector<8x128xf32>, vector<128x16xf32>, vector<8x16xf32> -> vector<8x16xf32>
    %c128_30 = arith.constant 128 : index
    %c0_31 = arith.constant 0 : index
    %51 = vector.load %arg7[%c128_30, %c0_31] : memref<129x16xf32, #tpu.memory_space<vmem>>, vector<1x16xf32>
    %52 = vector.broadcast %51 : vector<1x16xf32> to vector<8x16xf32>
    %53 = arith.addf %50, %52 : vector<8x16xf32>
    %cst_32 = arith.constant 0.000000e+00 : f32
    %54 = vector.broadcast %cst_32 : f32 to vector<8x16xf32>
    %55 = arith.maximumf %53, %54 : vector<8x16xf32>
    %c0_33 = arith.constant 0 : index
    %c0_34 = arith.constant 0 : index
    %56 = vector.load %arg8[%c0_33, %c0_34] : memref<17x128xf32, #tpu.memory_space<vmem>>, vector<16x128xf32>
    %cst_35 = arith.constant dense<0.000000e+00> : vector<8x128xf32>
    %57 = tpu.matmul %55, %56, %cst_35 {dimension_numbers = #tpu.dot_dimension_numbers<[1], [0], [0], [1], [0, 0, 1, 1], [], []>} : vector<8x16xf32>, vector<16x128xf32>, vector<8x128xf32> -> vector<8x128xf32>
    %c16_36 = arith.constant 16 : index
    %c0_37 = arith.constant 0 : index
    %58 = vector.load %arg8[%c16_36, %c0_37] : memref<17x128xf32, #tpu.memory_space<vmem>>, vector<1x128xf32>
    %59 = vector.broadcast %58 : vector<1x128xf32> to vector<8x128xf32>
    %60 = arith.addf %57, %59 : vector<8x128xf32>
    %61 = vector.extract_strided_slice %60 {offsets = [0, 0], sizes = [1, 128], strides = [1, 1]} : vector<8x128xf32> to vector<1x128xf32>
    %c0_38 = arith.constant 0 : index
    %c0_39 = arith.constant 0 : index
    %62 = vector.load %arg5[%c0_38, %c0_39] : memref<129x32xf32, #tpu.memory_space<vmem>>, vector<128x32xf32>
    %cst_40 = arith.constant dense<0.000000e+00> : vector<128x32xf32>
    %63 = tpu.matmul %44, %62, %cst_40 {dimension_numbers = #tpu.dot_dimension_numbers<[1], [0], [0], [1], [0, 0, 1, 1], [], []>} : vector<128x128xf32>, vector<128x32xf32>, vector<128x32xf32> -> vector<128x32xf32>
    %c128_41 = arith.constant 128 : index
    %c0_42 = arith.constant 0 : index
    %64 = vector.load %arg5[%c128_41, %c0_42] : memref<129x32xf32, #tpu.memory_space<vmem>>, vector<1x32xf32>
    %65 = vector.broadcast %64 : vector<1x32xf32> to vector<128x32xf32>
    %66 = arith.addf %63, %65 : vector<128x32xf32>
    %cst_43 = arith.constant 0.000000e+00 : f32
    %67 = vector.broadcast %cst_43 : f32 to vector<128x32xf32>
    %68 = arith.maximumf %66, %67 : vector<128x32xf32>
    %c0_44 = arith.constant 0 : index
    %c0_45 = arith.constant 0 : index
    %69 = vector.load %arg6[%c0_44, %c0_45] : memref<33x128xf32, #tpu.memory_space<vmem>>, vector<32x128xf32>
    %cst_46 = arith.constant dense<0.000000e+00> : vector<128x128xf32>
    %70 = tpu.matmul %68, %69, %cst_46 {dimension_numbers = #tpu.dot_dimension_numbers<[1], [0], [0], [1], [0, 0, 1, 1], [], []>} : vector<128x32xf32>, vector<32x128xf32>, vector<128x128xf32> -> vector<128x128xf32>
    %c32_47 = arith.constant 32 : index
    %c0_48 = arith.constant 0 : index
    %71 = vector.load %arg6[%c32_47, %c0_48] : memref<33x128xf32, #tpu.memory_space<vmem>>, vector<1x128xf32>
    %72 = vector.broadcast %71 : vector<1x128xf32> to vector<128x128xf32>
    %73 = arith.addf %70, %72 : vector<128x128xf32>
    %74 = vector.broadcast %61 : vector<1x128xf32> to vector<128x128xf32>
    %75 = arith.addf %73, %74 : vector<128x128xf32>
    %cst_49 = arith.constant 0.000000e+00 : f32
    %76 = vector.broadcast %cst_49 : f32 to vector<128x128xf32>
    %77 = arith.subf %76, %75 : vector<128x128xf32>
    %78 = math.exp %77 : vector<128x128xf32>
    %cst_50 = arith.constant 1.000000e+00 : f32
    %79 = vector.broadcast %cst_50 : f32 to vector<128x128xf32>
    %80 = arith.addf %79, %78 : vector<128x128xf32>
    %81 = tpu.reciprocal %80 {approx = true} : vector<128x128xf32> -> vector<128x128xf32>
    %82 = arith.subf %1, %3 : vector<128x128xf32>
    %83 = arith.mulf %81, %82 : vector<128x128xf32>
    %84 = arith.addf %3, %83 : vector<128x128xf32>
    %c0_51 = arith.constant 0 : index
    %c0_52 = arith.constant 0 : index
    %c0_53 = arith.constant 0 : index
    %85 = vector.load %arg9[%c0_51, %c0_52, %c0_53] : memref<1x128x128xf32, #tpu.memory_space<vmem>>, vector<1x128x128xf32>
    %86 = vector.shape_cast %85 : vector<1x128x128xf32> to vector<128x128xf32>
    %87 = vector.shape_cast %84 : vector<128x128xf32> to vector<1x128x128xf32>
    tpu.vector_store %arg9[%c0_51, %c0_52, %c0_53], %87 {strides = array<i32>} : memref<1x128x128xf32, #tpu.memory_space<vmem>>, vector<1x128x128xf32>,
    return
  }
  func.func @transform_0(%arg0: i32) -> (i32, i32, i32) {
    %c0_i32 = arith.constant 0 : i32
    %c0_i32_0 = arith.constant 0 : i32
    %c0_i32_1 = arith.constant 0 : i32
    return %arg0, %c0_i32, %c0_i32_0 : i32, i32, i32
  }
  func.func @transform_1(%arg0: i32) -> (i32, i32, i32) {
    %c0_i32 = arith.constant 0 : i32
    %c0_i32_0 = arith.constant 0 : i32
    %c0_i32_1 = arith.constant 0 : i32
    return %arg0, %c0_i32, %c0_i32_0 : i32, i32, i32
  }
  func.func @transform_2(%arg0: i32) -> (i32, i32) {
    %c0_i32 = arith.constant 0 : i32
    %c0_i32_0 = arith.constant 0 : i32
    %c0_i32_1 = arith.constant 0 : i32
    return %c0_i32, %c0_i32_0 : i32, i32
  }
  func.func @transform_3(%arg0: i32) -> (i32, i32) {
    %c0_i32 = arith.constant 0 : i32
    %c0_i32_0 = arith.constant 0 : i32
    %c0_i32_1 = arith.constant 0 : i32
    return %c0_i32, %c0_i32_0 : i32, i32
  }
  func.func @transform_4(%arg0: i32) -> (i32, i32) {
    %c0_i32 = arith.constant 0 : i32
    %c0_i32_0 = arith.constant 0 : i32
    %c0_i32_1 = arith.constant 0 : i32
    return %c0_i32, %c0_i32_0 : i32, i32
  }
  func.func @transform_5(%arg0: i32) -> (i32, i32) {
    %c0_i32 = arith.constant 0 : i32
    %c0_i32_0 = arith.constant 0 : i32
    %c0_i32_1 = arith.constant 0 : i32
    return %c0_i32, %c0_i32_0 : i32, i32
  }
  func.func @transform_6(%arg0: i32) -> (i32, i32) {
    %c0_i32 = arith.constant 0 : i32
    %c0_i32_0 = arith.constant 0 : i32
    %c0_i32_1 = arith.constant 0 : i32
    return %c0_i32, %c0_i32_0 : i32, i32
  }
  func.func @transform_7(%arg0: i32) -> (i32, i32) {
    %c0_i32 = arith.constant 0 : i32
    %c0_i32_0 = arith.constant 0 : i32
    %c0_i32_1 = arith.constant 0 : i32
    return %c0_i32, %c0_i32_0 : i32, i32
  }
  func.func @transform_8(%arg0: i32) -> (i32, i32, i32) {
    %c0_i32 = arith.constant 0 : i32
    %c0_i32_0 = arith.constant 0 : i32
    %c0_i32_1 = arith.constant 0 : i32
    return %arg0, %c0_i32, %c0_i32_0 : i32, i32, i32
  }
}

</mosaic_0001>

<llo_original>
// kernel: tile.68
$region0: #{tile.68}
  #allocation0 [shape = 's32[1]{0}', space=sflag, size = 0x4, scoped, tag = 'scoped memory for tile.68']
  %s0 = inlined_call_operand.vmem [shape: f32[64], index: 0, kind: input, shape index: {}]
  %s1 = inlined_call_operand.vmem [shape: f32[2,64], index: 1, kind: output, shape index: {}]
  // Predicated region
  $region2: #{tile.68} parent=0 // pred_check
    _
  $region3: #{tile.68} parent=0 // pred_check_branch
    %3 = sbr.rel (0) target = $region5
  $region4: #{tile.68} parent=0 // pred_region
    _
  $region5: #{tile.68} parent=0 // pred_fallthru
    _
  %v4 = vld [vmem:[%s0] ss:$0 sm:$0xff]
  %5 = vst [vmem:[%s1] sm:$0x3] %v4

// kernel: tile.69
$region0: #{tile.69}
  %s0 = inlined_call_operand.vmem [shape: f32[2,64], index: 0, kind: input, shape index: {}]
  %s1 = inlined_call_operand.vmem [shape: f32[1,128], index: 1, kind: output, shape index: {}]
  $region1: #{tile.69} parent=0
    #allocation0 [shape = 'u8[4096]{0}', space=vmem, size = 0x1000, scoped, tag = 'scoped mem for output reshape']
    #allocation1 [shape = 'u8[4096]{0}', space=vmem, size = 0x1000, scoped, tag = 'scoped mem for input reshape']
    %s3 = sshllo.u32 0, 2
    %v4 = vld [vmem:[%s0] sm:%s3]
    %5 = vst [vmem:[#allocation1] sm:%s3] %v4
    %v6 = vld [vmem:[#allocation1] sm:$0x1]
    %vm7 = vcmask 523264
    %8 = vst.msk [vmem:[#allocation0] sm:$0x1] %vm7, %v6
    %s9 = scalar_lea.vmem [#allocation1], 1
    %v10 = vld [vmem:[%s9] sm:$0x1]
    %11 = vrot.lane.b32.xlu0 %v10, 64
    %v12 = vpop.permute.xlu0 %11
    %vm13 = vcmask 1048064
    %14 = vst.msk [vmem:[#allocation0] sm:$0x1] %vm13, %v12
    %s16 = sshllo.u32 0, 1
    %v18 = vld [vmem:[#allocation0] sm:%s16]
    %s19 = sshllo.u32 0, 1
    %20 = vst [vmem:[%s1] sm:%s19] %v18

// kernel: tile.38
$region0: #{tile.38}
  #allocation0 [shape = 's32[1]{0}', space=sflag, size = 0x4, scoped, tag = 'scoped memory for tile.38']
  %s0 = inlined_call_operand.vmem [shape: f32[16], index: 0, kind: input, shape index: {}]
  %s1 = inlined_call_operand.vmem [shape: f32[2,16], index: 1, kind: output, shape index: {}]
  // Predicated region
  $region2: #{tile.38} parent=0 // pred_check
    _
  $region3: #{tile.38} parent=0 // pred_check_branch
    %3 = sbr.rel (0) target = $region5
  $region4: #{tile.38} parent=0 // pred_region
    _
  $region5: #{tile.38} parent=0 // pred_fallthru
    _
  %v4 = vld [vmem:[%s0] ss:$0 sm:$0xff]
  %5 = vst [vmem:[%s1] sm:$0x3] %v4

// kernel: tile.43
$region0: #{tile.43}
  %s0 = inlined_call_operand.vmem [shape: f32[2,16], index: 0, kind: input, shape index: {}]
  %s1 = inlined_call_operand.vmem [shape: f32[1,32], index: 1, kind: output, shape index: {}]
  $region1: #{tile.43} parent=0
    #allocation0 [shape = 'u8[4096]{0}', space=vmem, size = 0x1000, scoped, tag = 'scoped mem for output reshape']
    #allocation1 [shape = 'u8[4096]{0}', space=vmem, size = 0x1000, scoped, tag = 'scoped mem for input reshape']
    %s3 = sshllo.u32 0, 2
    %v4 = vld [vmem:[%s0] sm:%s3]
    %5 = vst [vmem:[#allocation1] sm:%s3] %v4
    %v6 = vld [vmem:[#allocation1] sm:$0x1]
    %vm7 = vcmask 130048
    %8 = vst.msk [vmem:[#allocation0] sm:$0x1] %vm7, %v6
    %s9 = scalar_lea.vmem [#allocation1], 1
    %v10 = vld [vmem:[%s9] sm:$0x1]
    %11 = vrot.lane.b32.xlu0 %v10, 16
    %v12 = vpop.permute.xlu0 %11
    %vm13 = vcmask 261248
    %14 = vst.msk [vmem:[#allocation0] sm:$0x1] %vm13, %v12
    %s16 = sshllo.u32 0, 1
    %v18 = vld [vmem:[#allocation0] sm:%s16]
    %s19 = sshllo.u32 0, 1
    %20 = vst [vmem:[%s1] sm:%s19] %v18

// kernel: tile.64
$region0: #{tile.64}
  %s0 = inlined_call_operand.vmem [shape: f32[16,2,64], index: 0, kind: input, shape index: {}]
  %s1 = inlined_call_operand.vmem [shape: f32[16,128], index: 1, kind: output, shape index: {}]
  $region1: #{tile.64} parent=0
    #allocation0 [shape = 'u8[65536]{0}', space=vmem, size = 0x10000, scoped, tag = 'scoped mem for input reshape']
    %s3 = sshllo.u32 0, 2
    %s4 = smul.addr 2, 15
    %s5 = scalar_lea.vmem %s0, %s4
    %v6 = vld [vmem:[%s5] sm:%s3]
    %s7 = scalar_lea.vmem [#allocation0], 120
    %8 = vst [vmem:[%s7] sm:%s3] %v6
    %s9 = smul.addr 2, 14
    %s10 = scalar_lea.vmem %s0, %s9
    %v11 = vld [vmem:[%s10] sm:%s3]
    %s12 = scalar_lea.vmem [#allocation0], 112
    %13 = vst [vmem:[%s12] sm:%s3] %v11
    %s14 = smul.addr 2, 13
    %s15 = scalar_lea.vmem %s0, %s14
    %v16 = vld [vmem:[%s15] sm:%s3]
    %s17 = scalar_lea.vmem [#allocation0], 104
    %18 = vst [vmem:[%s17] sm:%s3] %v16
    %s19 = smul.addr 2, 12
    %s20 = scalar_lea.vmem %s0, %s19
    %v21 = vld [vmem:[%s20] sm:%s3]
    %s22 = scalar_lea.vmem [#allocation0], 96
    %23 = vst [vmem:[%s22] sm:%s3] %v21
    %s24 = smul.addr 2, 11
    %s25 = scalar_lea.vmem %s0, %s24
    %v26 = vld [vmem:[%s25] sm:%s3]
    %s27 = scalar_lea.vmem [#allocation0], 88
    %28 = vst [vmem:[%s27] sm:%s3] %v26
    %s29 = smul.addr 2, 10
    %s30 = scalar_lea.vmem %s0, %s29
    %v31 = vld [vmem:[%s30] sm:%s3]
    %s32 = scalar_lea.vmem [#allocation0], 80
    %33 = vst [vmem:[%s32] sm:%s3] %v31
    %s34 = smul.addr 2, 9
    %s35 = scalar_lea.vmem %s0, %s34
    %v36 = vld [vmem:[%s35] sm:%s3]
    %s37 = scalar_lea.vmem [#allocation0], 72
    %38 = vst [vmem:[%s37] sm:%s3] %v36
    %s39 = smul.addr 2, 8
    %s40 = scalar_lea.vmem %s0, %s39
    %v41 = vld [vmem:[%s40] sm:%s3]
    %s42 = scalar_lea.vmem [#allocation0], 64
    %43 = vst [vmem:[%s42] sm:%s3] %v41
    %s44 = smul.addr 2, 7
    %s45 = scalar_lea.vmem %s0, %s44
    %v46 = vld [vmem:[%s45] sm:%s3]
    %s47 = scalar_lea.vmem [#allocation0], 56
    %48 = vst [vmem:[%s47] sm:%s3] %v46
    %s49 = smul.addr 2, 6
    %s50 = scalar_lea.vmem %s0, %s49
    %v51 = vld [vmem:[%s50] sm:%s3]
    %s52 = scalar_lea.vmem [#allocation0], 48
    %53 = vst [vmem:[%s52] sm:%s3] %v51
    %s54 = smul.addr 2, 5
    %s55 = scalar_lea.vmem %s0, %s54
    %v56 = vld [vmem:[%s55] sm:%s3]
    %s57 = scalar_lea.vmem [#allocation0], 40
    %58 = vst [vmem:[%s57] sm:%s3] %v56
    %s59 = smul.addr 2, 4
    %s60 = scalar_lea.vmem %s0, %s59
    %v61 = vld [vmem:[%s60] sm:%s3]
    %s62 = scalar_lea.vmem [#allocation0], 32
    %63 = vst [vmem:[%s62] sm:%s3] %v61
    %s64 = smul.addr 2, 3
    %s65 = scalar_lea.vmem %s0, %s64
    %v66 = vld [vmem:[%s65] sm:%s3]
    %s67 = scalar_lea.vmem [#allocation0], 24
    %68 = vst [vmem:[%s67] sm:%s3] %v66
    %s69 = smul.addr 2, 2
    %s70 = scalar_lea.vmem %s0, %s69
    %v71 = vld [vmem:[%s70] sm:%s3]
    %s72 = scalar_lea.vmem [#allocation0], 16
    %73 = vst [vmem:[%s72] sm:%s3] %v71
    %s74 = scalar_lea.vmem %s0, 2
    %v75 = vld [vmem:[%s74] sm:%s3]
    %s76 = scalar_lea.vmem [#allocation0], 8
    %77 = vst [vmem:[%s76] sm:%s3] %v75
    %v78 = vld [vmem:[%s0] sm:%s3]
    %79 = vst [vmem:[#allocation0] sm:%s3] %v78
    %v80 = vld [vmem:[#allocation0] ss:$8 sm:$0xf]
    %v81 = vld [vmem:[#allocation0] ss:$8 sm:$0xf0]
    %vm82 = vcmask 1047556
    %v83 = vsel %vm82, %v81, %v80
    %vm84 = vcmask 523264
    %85 = vst.msk [vmem:[%s1] sm:$0xff] %vm84, %v83
    %s86 = scalar_lea.vmem [#allocation0], 64
    %v87 = vld [vmem:[%s86] ss:$8 sm:$0xf]
    %s88 = scalar_lea.vmem [#allocation0], 64
    %v89 = vld [vmem:[%s88] ss:$8 sm:$0xf0]
    %vm90 = vcmask 1047556
    %v91 = vsel %vm90, %v89, %v87
    %vm92 = vcmask 523264
    %s93 = scalar_lea.vmem %s1, 8
    %94 = vst.msk [vmem:[%s93] sm:$0xff] %vm92, %v91
    %s95 = scalar_lea.vmem [#allocation0], 1
    %v96 = vld [vmem:[%s95] ss:$8 sm:$0xf]
    %s97 = scalar_lea.vmem [#allocation0], 1
    %v98 = vld [vmem:[%s97] ss:$8 sm:$0xf0]
    %vm99 = vcmask 1047556
    %v100 = vsel %vm99, %v98, %v96
    %101 = vrot.lane.b32.xlu0 %v100, 64
    %v102 = vpop.permute.xlu0 %101
    %vm103 = vcmask 1048064
    %104 = vst.msk [vmem:[%s1] sm:$0xff] %vm103, %v102
    %s105 = scalar_lea.vmem [#allocation0], 65
    %v106 = vld [vmem:[%s105] ss:$8 sm:$0xf]
    %s107 = scalar_lea.vmem [#allocation0], 65
    %v108 = vld [vmem:[%s107] ss:$8 sm:$0xf0]
    %vm109 = vcmask 1047556
    %v110 = vsel %vm109, %v108, %v106
    %111 = vrot.lane.b32.xlu0 %v110, 64
    %v112 = vpop.permute.xlu0 %111
    %vm113 = vcmask 1048064
    %s114 = scalar_lea.vmem %s1, 8
    %115 = vst.msk [vmem:[%s114] sm:$0xff] %vm113, %v112

// kernel: iaff_forward.1
$region0: #{iaff_forward.1}
  #allocation0 [shape = 'u32[]', space=smem, size = 0x4, offset = 0x4, fixed_abs, tag = 'smem constant byte address 0x4 - core index']
  #allocation1 [shape = 'u32[144,128]{1,0:T(1,128)}', space=vmem, size = 0x12000, scoped, tag = 'internal scratch']
  %s0 = inlined_call_operand.vmem [shape: f32[2,128,128], index: 0, kind: input, shape index: {}]
  %s1 = inlined_call_operand.vmem [shape: f32[2,128,128], index: 1, kind: input, shape index: {}]
  %s2 = inlined_call_operand.vmem [shape: f32[129,32], index: 2, kind: input, shape index: {}]
  %s3 = inlined_call_operand.vmem [shape: f32[33,128], index: 3, kind: input, shape index: {}]
  %s4 = inlined_call_operand.vmem [shape: f32[129,32], index: 4, kind: input, shape index: {}]
  %s5 = inlined_call_operand.vmem [shape: f32[33,128], index: 5, kind: input, shape index: {}]
  %s6 = inlined_call_operand.vmem [shape: f32[129,16], index: 6, kind: input, shape index: {}]
  %s7 = inlined_call_operand.vmem [shape: f32[17,128], index: 7, kind: input, shape index: {}]
  %s8 = inlined_call_operand.vmem [shape: f32[2,128,128], index: 8, kind: output, shape index: {}]
  %s9 = sld [smem:[#allocation0]]
  $region65: #{iaff_forward.1} parent=0
    _
  %s11 = ssub.s32 1, %s9
  %s12 = scalar_select 0, %s11, %s9
  loop: start=0, step=1, limit=4
  $region2: #{iaff_forward.1} parent=0 // loop_pre_header
    _
  $region3: #{iaff_forward.1} parent=0 // loop_header
    %s14 = sphi 0, %s18
    %p15 = scmp.ge.s32.totalorder %s14, 4
    %s24 = sphi 0, %s26
    %s27 = sphi 0, %s24
    %s28 = sphi 0, %s27
    %s44 = sphi 0, %s28
    %s50 = sphi 0, %s52
    %s53 = sphi 0, %s50
    %s54 = sphi 0, %s53
    %s70 = sphi 0, %s54
    %s74 = sphi 0, %s74
    %s76 = sphi 0, %s74
    %s77 = sphi 0, %s76
    %s91 = sphi 0, %s77
    %s95 = sphi 0, %s95
    %s97 = sphi 0, %s95
    %s98 = sphi 0, %s97
    %s112 = sphi 0, %s98
    %s116 = sphi 0, %s116
    %s118 = sphi 0, %s116
    %s119 = sphi 0, %s118
    %s133 = sphi 0, %s119
    %s137 = sphi 0, %s137
    %s139 = sphi 0, %s137
    %s140 = sphi 0, %s139
    %s154 = sphi 0, %s140
    %s158 = sphi 0, %s158
    %s160 = sphi 0, %s158
    %s161 = sphi 0, %s160
    %s175 = sphi 0, %s161
    %s179 = sphi 0, %s179
    %s181 = sphi 0, %s179
    %s182 = sphi 0, %s181
    %s196 = sphi 0, %s182
    %s202 = sphi 0, %s204
    %s205 = sphi 0, %s202
    %s206 = sphi 0, %s205
    %s222 = sphi 0, %s206
  $region4: #{iaff_forward.1} parent=0 // loop_header_branch
    %17 = sbr.rel (%p15) target = $region8
  $region5: #{iaff_forward.1} parent=0 // loop_body
    %s19 = ssub.s32 %s14, 1
    %s20 = ssub.s32 %s14, 2
    %s21 = sadd.s32 %s14, 1
    %s22 = ssub.s32 %s14, %s21
    %p23 = scmp.eq.s32.totalorder %s22, 0
    %s25 = sadd.s32 %s24, 1
    %s26 = scalar_select %p23, %s24, %s25
    %p29 = pneg %p23
    %p30 = scmp.eq.s32.totalorder %s14, 1
    %p31 = por %p29, %p30
    %p32 = scmp.ne.s32.totalorder %s24, %s27
    %p33 = scmp.eq.s32.totalorder %s14, 0
    %p34 = por %p32, %p33
    %p35 = scmp.ne.s32.totalorder %s24, %s27
    %p36 = scmp.eq.s32.totalorder %s19, 1
    %p37 = por %p35, %p36
    %p38 = scmp.ne.s32.totalorder %s27, %s28
    %p39 = scmp.eq.s32.totalorder %s19, 0
    %p40 = por %p38, %p39
    %p41 = scmp.ne.s32.totalorder %s27, %s28
    %p42 = scmp.eq.s32.totalorder %s20, 1
    %p43 = por %p41, %p42
    %p45 = scmp.ne.s32.totalorder %s28, %s44
    %p46 = scmp.eq.s32.totalorder %s20, 0
    %p47 = por %p45, %p46
    %s48 = ssub.s32 %s14, %s21
    %p49 = scmp.eq.s32.totalorder %s48, 0
    %s51 = sadd.s32 %s50, 1
    %s52 = scalar_select %p49, %s50, %s51
    %p55 = pneg %p49
    %p56 = scmp.eq.s32.totalorder %s14, 1
    %p57 = por %p55, %p56
    %p58 = scmp.ne.s32.totalorder %s50, %s53
    %p59 = scmp.eq.s32.totalorder %s14, 0
    %p60 = por %p58, %p59
    %p61 = scmp.ne.s32.totalorder %s50, %s53
    %p62 = scmp.eq.s32.totalorder %s19, 1
    %p63 = por %p61, %p62
    %p64 = scmp.ne.s32.totalorder %s53, %s54
    %p65 = scmp.eq.s32.totalorder %s19, 0
    %p66 = por %p64, %p65
    %p67 = scmp.ne.s32.totalorder %s53, %s54
    %p68 = scmp.eq.s32.totalorder %s20, 1
    %p69 = por %p67, %p68
    %p71 = scmp.ne.s32.totalorder %s54, %s70
    %p72 = scmp.eq.s32.totalorder %s20, 0
    %p73 = por %p71, %p72
    %s75 = sadd.s32 %s74, 1
    %p78 = scmp.eq.s32.totalorder %s14, 1
    %p79 = scmp.ne.s32.totalorder %s74, %s76
    %p80 = scmp.eq.s32.totalorder %s14, 0
    %p81 = por %p79, %p80
    %p82 = scmp.ne.s32.totalorder %s74, %s76
    %p83 = scmp.eq.s32.totalorder %s19, 1
    %p84 = por %p82, %p83
    %p85 = scmp.ne.s32.totalorder %s76, %s77
    %p86 = scmp.eq.s32.totalorder %s19, 0
    %p87 = por %p85, %p86
    %p88 = scmp.ne.s32.totalorder %s76, %s77
    %p89 = scmp.eq.s32.totalorder %s20, 1
    %p90 = por %p88, %p89
    %p92 = scmp.ne.s32.totalorder %s77, %s91
    %p93 = scmp.eq.s32.totalorder %s20, 0
    %p94 = por %p92, %p93
    %s96 = sadd.s32 %s95, 1
    %p99 = scmp.eq.s32.totalorder %s14, 1
    %p100 = scmp.ne.s32.totalorder %s95, %s97
    %p101 = scmp.eq.s32.totalorder %s14, 0
    %p102 = por %p100, %p101
    %p103 = scmp.ne.s32.totalorder %s95, %s97
    %p104 = scmp.eq.s32.totalorder %s19, 1
    %p105 = por %p103, %p104
    %p106 = scmp.ne.s32.totalorder %s97, %s98
    %p107 = scmp.eq.s32.totalorder %s19, 0
    %p108 = por %p106, %p107
    %p109 = scmp.ne.s32.totalorder %s97, %s98
    %p110 = scmp.eq.s32.totalorder %s20, 1
    %p111 = por %p109, %p110
    %p113 = scmp.ne.s32.totalorder %s98, %s112
    %p114 = scmp.eq.s32.totalorder %s20, 0
    %p115 = por %p113, %p114
    %s117 = sadd.s32 %s116, 1
    %p120 = scmp.eq.s32.totalorder %s14, 1
    %p121 = scmp.ne.s32.totalorder %s116, %s118
    %p122 = scmp.eq.s32.totalorder %s14, 0
    %p123 = por %p121, %p122
    %p124 = scmp.ne.s32.totalorder %s116, %s118
    %p125 = scmp.eq.s32.totalorder %s19, 1
    %p126 = por %p124, %p125
    %p127 = scmp.ne.s32.totalorder %s118, %s119
    %p128 = scmp.eq.s32.totalorder %s19, 0
    %p129 = por %p127, %p128
    %p130 = scmp.ne.s32.totalorder %s118, %s119
    %p131 = scmp.eq.s32.totalorder %s20, 1
    %p132 = por %p130, %p131
    %p134 = scmp.ne.s32.totalorder %s119, %s133
    %p135 = scmp.eq.s32.totalorder %s20, 0
    %p136 = por %p134, %p135
    %s138 = sadd.s32 %s137, 1
    %p141 = scmp.eq.s32.totalorder %s14, 1
    %p142 = scmp.ne.s32.totalorder %s137, %s139
    %p143 = scmp.eq.s32.totalorder %s14, 0
    %p144 = por %p142, %p143
    %p145 = scmp.ne.s32.totalorder %s137, %s139
    %p146 = scmp.eq.s32.totalorder %s19, 1
    %p147 = por %p145, %p146
    %p148 = scmp.ne.s32.totalorder %s139, %s140
    %p149 = scmp.eq.s32.totalorder %s19, 0
    %p150 = por %p148, %p149
    %p151 = scmp.ne.s32.totalorder %s139, %s140
    %p152 = scmp.eq.s32.totalorder %s20, 1
    %p153 = por %p151, %p152
    %p155 = scmp.ne.s32.totalorder %s140, %s154
    %p156 = scmp.eq.s32.totalorder %s20, 0
    %p157 = por %p155, %p156
    %s159 = sadd.s32 %s158, 1
    %p162 = scmp.eq.s32.totalorder %s14, 1
    %p163 = scmp.ne.s32.totalorder %s158, %s160
    %p164 = scmp.eq.s32.totalorder %s14, 0
    %p165 = por %p163, %p164
    %p166 = scmp.ne.s32.totalorder %s158, %s160
    %p167 = scmp.eq.s32.totalorder %s19, 1
    %p168 = por %p166, %p167
    %p169 = scmp.ne.s32.totalorder %s160, %s161
    %p170 = scmp.eq.s32.totalorder %s19, 0
    %p171 = por %p169, %p170
    %p172 = scmp.ne.s32.totalorder %s160, %s161
    %p173 = scmp.eq.s32.totalorder %s20, 1
    %p174 = por %p172, %p173
    %p176 = scmp.ne.s32.totalorder %s161, %s175
    %p177 = scmp.eq.s32.totalorder %s20, 0
    %p178 = por %p176, %p177
    %s180 = sadd.s32 %s179, 1
    %p183 = scmp.eq.s32.totalorder %s14, 1
    %p184 = scmp.ne.s32.totalorder %s179, %s181
    %p185 = scmp.eq.s32.totalorder %s14, 0
    %p186 = por %p184, %p185
    %p187 = scmp.ne.s32.totalorder %s179, %s181
    %p188 = scmp.eq.s32.totalorder %s19, 1
    %p189 = por %p187, %p188
    %p190 = scmp.ne.s32.totalorder %s181, %s182
    %p191 = scmp.eq.s32.totalorder %s19, 0
    %p192 = por %p190, %p191
    %p193 = scmp.ne.s32.totalorder %s181, %s182
    %p194 = scmp.eq.s32.totalorder %s20, 1
    %p195 = por %p193, %p194
    %p197 = scmp.ne.s32.totalorder %s182, %s196
    %p198 = scmp.eq.s32.totalorder %s20, 0
    %p199 = por %p197, %p198
    %s200 = ssub.s32 %s14, %s21
    %p201 = scmp.eq.s32.totalorder %s200, 0
    %s203 = sadd.s32 %s202, 1
    %s204 = scalar_select %p201, %s202, %s203
    %p207 = pneg %p201
    %p208 = scmp.eq.s32.totalorder %s14, 1
    %p209 = por %p207, %p208
    %p210 = scmp.ne.s32.totalorder %s202, %s205
    %p211 = scmp.eq.s32.totalorder %s14, 0
    %p212 = por %p210, %p211
    %p213 = scmp.ne.s32.totalorder %s202, %s205
    %p214 = scmp.eq.s32.totalorder %s19, 1
    %p215 = por %p213, %p214
    %p216 = scmp.ne.s32.totalorder %s205, %s206
    %p217 = scmp.eq.s32.totalorder %s19, 0
    %p218 = por %p216, %p217
    %p219 = scmp.ne.s32.totalorder %s205, %s206
    %p220 = scmp.eq.s32.totalorder %s20, 1
    %p221 = por %p219, %p220
    %p223 = scmp.ne.s32.totalorder %s206, %s222
    %p224 = scmp.eq.s32.totalorder %s20, 0
    %p225 = por %p223, %p224
    %p226 = scmp.le.s32.totalorder 1, %s14
    %p227 = scmp.lt.s32.totalorder %s14, 3
    %p228 = pnand %p226, %p227
    %p229 = pneg %p228
    // Predicated region
    $region9: #{iaff_forward.1} parent=5 // pred_check
      _
    $region10: #{iaff_forward.1} parent=5 // pred_check_branch
      %231 = sbr.rel (%p228) target = $region12
    $region11: #{iaff_forward.1} parent=5 // pred_region
      %s232 = ssub.s32 %s14, 1
      // Predicated region
      $region13: #{iaff_forward.1} parent=11 // pred_check
        %p233 = pneg %p87
      $region14: #{iaff_forward.1} parent=11 // pred_check_branch
        %235 = sbr.rel (%p233) target = $region16
      $region15: #{iaff_forward.1} parent=11 // pred_region
        _
      $region16: #{iaff_forward.1} parent=11 // pred_fallthru
        _
      // Predicated region
      $region17: #{iaff_forward.1} parent=11 // pred_check
        %p236 = pneg %p108
      $region18: #{iaff_forward.1} parent=11 // pred_check_branch
        %238 = sbr.rel (%p236) target = $region20
      $region19: #{iaff_forward.1} parent=11 // pred_region
        _
      $region20: #{iaff_forward.1} parent=11 // pred_fallthru
        _
      // Predicated region
      $region21: #{iaff_forward.1} parent=11 // pred_check
        %p239 = pneg %p129
      $region22: #{iaff_forward.1} parent=11 // pred_check_branch
        %241 = sbr.rel (%p239) target = $region24
      $region23: #{iaff_forward.1} parent=11 // pred_region
        _
      $region24: #{iaff_forward.1} parent=11 // pred_fallthru
        _
      // Predicated region
      $region25: #{iaff_forward.1} parent=11 // pred_check
        %p242 = pneg %p150
      $region26: #{iaff_forward.1} parent=11 // pred_check_branch
        %244 = sbr.rel (%p242) target = $region28
      $region27: #{iaff_forward.1} parent=11 // pred_region
        _
      $region28: #{iaff_forward.1} parent=11 // pred_fallthru
        _
      // Predicated region
      $region29: #{iaff_forward.1} parent=11 // pred_check
        %p245 = pneg %p171
      $region30: #{iaff_forward.1} parent=11 // pred_check_branch
        %247 = sbr.rel (%p245) target = $region32
      $region31: #{iaff_forward.1} parent=11 // pred_region
        _
      $region32: #{iaff_forward.1} parent=11 // pred_fallthru
        _
      // Predicated region
      $region33: #{iaff_forward.1} parent=11 // pred_check
        %p248 = pneg %p192
      $region34: #{iaff_forward.1} parent=11 // pred_check_branch
        %250 = sbr.rel (%p248) target = $region36
      $region35: #{iaff_forward.1} parent=11 // pred_region
        _
      $region36: #{iaff_forward.1} parent=11 // pred_fallthru
        _
    $region12: #{iaff_forward.1} parent=5 // pred_fallthru
      _
    %p251 = scmp.lt.s32.totalorder %s14, 2
    // Predicated region
    $region37: #{iaff_forward.1} parent=5 // pred_check
      %p252 = pneg %p251
    $region38: #{iaff_forward.1} parent=5 // pred_check_branch
      %254 = sbr.rel (%p252) target = $region40
    $region39: #{iaff_forward.1} parent=5 // pred_region
      // Predicated region
      $region41: #{iaff_forward.1} parent=39 // pred_check
        %p255 = pneg %p34
      $region42: #{iaff_forward.1} parent=39 // pred_check_branch
        %257 = sbr.rel (%p255) target = $region44
      $region43: #{iaff_forward.1} parent=39 // pred_region
        %p258 = scmp.lt.s32.totalorder %s14, 1
        %s259 = scalar_select %p258, %s14, 1
        %s260 = smul.addr %s259, 16
        %s261 = smul.addr %s260, 8
        %s262 = scalar_lea.vmem %s0, %s261
      $region44: #{iaff_forward.1} parent=39 // pred_fallthru
        _
      // Predicated region
      $region45: #{iaff_forward.1} parent=39 // pred_check
        %p263 = pneg %p60
      $region46: #{iaff_forward.1} parent=39 // pred_check_branch
        %265 = sbr.rel (%p263) target = $region48
      $region47: #{iaff_forward.1} parent=39 // pred_region
        %p266 = scmp.lt.s32.totalorder %s14, 1
        %s267 = scalar_select %p266, %s14, 1
        %s268 = smul.addr %s267, 16
        %s269 = smul.addr %s268, 8
        %s270 = scalar_lea.vmem %s1, %s269
      $region48: #{iaff_forward.1} parent=39 // pred_fallthru
        _
    $region40: #{iaff_forward.1} parent=5 // pred_fallthru
      _
    %p271 = scmp.le.s32.totalorder 1, %s14
    %p272 = scmp.lt.s32.totalorder %s14, 3
    %p273 = pnand %p271, %p272
    %p274 = pneg %p273
    // Predicated region
    $region49: #{iaff_forward.1} parent=5 // pred_check
      _
    $region50: #{iaff_forward.1} parent=5 // pred_check_branch
      %276 = sbr.rel (%p273) target = $region52
    $region51: #{iaff_forward.1} parent=5 // pred_region
      %s277 = ssub.s32 %s14, 1
      %p278 = scmp.lt.s32.totalorder %s19, 1
      %s279 = scalar_select %p278, %s19, 1
      %s280 = smul.addr %s279, 16
      %s281 = smul.addr %s280, 8
      %s282 = scalar_lea.vmem %s0, %s281
      %p283 = pneg %p40
      %p284 = pneg %p37
      %p285 = scmp.lt.s32.totalorder %s19, 1
      %s286 = scalar_select %p285, %s19, 1
      %s287 = smul.addr %s286, 16
      %s288 = smul.addr %s287, 8
      %s289 = scalar_lea.vmem %s1, %s288
      %p290 = pneg %p66
      %p291 = pneg %p63
      %p292 = pneg %p87
      %p293 = pneg %p84
      %p294 = pneg %p108
      %p295 = pneg %p105
      %p296 = pneg %p129
      %p297 = pneg %p126
      %p298 = pneg %p150
      %p299 = pneg %p147
      %p300 = pneg %p171
      %p301 = pneg %p168
      %p302 = pneg %p192
      %p303 = pneg %p189
      %p304 = pneg %p218
      %p305 = pneg %p215
      %p306 = scmp.lt.s32.totalorder %s19, 1
      %s307 = scalar_select %p306, %s19, 1
      %s308 = smul.addr %s307, 16
      %s309 = smul.addr %s308, 8
      %s310 = scalar_lea.vmem %s8, %s309
      %p311 = scmp.lt.s32.totalorder %s19, 1
      %s312 = scalar_select %p311, %s19, 1
      %s313 = smul.addr %s312, 16
      %s314 = smul.addr %s313, 8
      %s315 = scalar_lea.vmem %s0, %s314
      %p316 = scmp.lt.s32.totalorder %s19, 1
      %s317 = scalar_select %p316, %s19, 1
      %s318 = smul.addr %s317, 16
      %s319 = smul.addr %s318, 8
      %s320 = scalar_lea.vmem %s1, %s319
      %p321 = scmp.lt.s32.totalorder %s19, 1
      %s322 = scalar_select %p321, %s19, 1
      %s323 = smul.addr %s322, 16
      %s324 = smul.addr %s323, 8
      %s325 = scalar_lea.vmem %s8, %s324
      %v326 = vld [vmem:[%s315] sm:$0xff]
      %v327 = vld [vmem:[%s315 + $0x8] sm:$0xff]
      %v328 = vld [vmem:[%s315 + $0x10] sm:$0xff]
      %v329 = vld [vmem:[%s315 + $0x18] sm:$0xff]
      %v330 = vld [vmem:[%s315 + $0x20] sm:$0xff]
      %v331 = vld [vmem:[%s315 + $0x28] sm:$0xff]
      %v332 = vld [vmem:[%s315 + $0x30] sm:$0xff]
      %v333 = vld [vmem:[%s315 + $0x38] sm:$0xff]
      %v334 = vld [vmem:[%s315 + $0x40] sm:$0xff]
      %v335 = vld [vmem:[%s315 + $0x48] sm:$0xff]
      %v336 = vld [vmem:[%s315 + $0x50] sm:$0xff]
      %v337 = vld [vmem:[%s315 + $0x58] sm:$0xff]
      %v338 = vld [vmem:[%s315 + $0x60] sm:$0xff]
      %v339 = vld [vmem:[%s315 + $0x68] sm:$0xff]
      %v340 = vld [vmem:[%s315 + $0x70] sm:$0xff]
      %v341 = vld [vmem:[%s315 + $0x78] sm:$0xff]
      %v342 = vld [vmem:[%s320] sm:$0xff]
      %v343 = vld [vmem:[%s320 + $0x8] sm:$0xff]
      %v344 = vld [vmem:[%s320 + $0x10] sm:$0xff]
      %v345 = vld [vmem:[%s320 + $0x18] sm:$0xff]
      %v346 = vld [vmem:[%s320 + $0x20] sm:$0xff]
      %v347 = vld [vmem:[%s320 + $0x28] sm:$0xff]
      %v348 = vld [vmem:[%s320 + $0x30] sm:$0xff]
      %v349 = vld [vmem:[%s320 + $0x38] sm:$0xff]
      %v350 = vld [vmem:[%s320 + $0x40] sm:$0xff]
      %v351 = vld [vmem:[%s320 + $0x48] sm:$0xff]
      %v352 = vld [vmem:[%s320 + $0x50] sm:$0xff]
      %v353 = vld [vmem:[%s320 + $0x58] sm:$0xff]
      %v354 = vld [vmem:[%s320 + $0x60] sm:$0xff]
      %v355 = vld [vmem:[%s320 + $0x68] sm:$0xff]
      %v356 = vld [vmem:[%s320 + $0x70] sm:$0xff]
      %v357 = vld [vmem:[%s320 + $0x78] sm:$0xff]
      %v358 = vadd.f32 %v326, %v342
      %v359 = vadd.f32 %v327, %v343
      %v360 = vadd.f32 %v328, %v344
      %v361 = vadd.f32 %v329, %v345
      %v362 = vadd.f32 %v330, %v346
      %v363 = vadd.f32 %v331, %v347
      %v364 = vadd.f32 %v332, %v348
      %v365 = vadd.f32 %v333, %v349
      %v366 = vadd.f32 %v334, %v350
      %v367 = vadd.f32 %v335, %v351
      %v368 = vadd.f32 %v336, %v352
      %v369 = vadd.f32 %v337, %v353
      %v370 = vadd.f32 %v338, %v354
      %v371 = vadd.f32 %v339, %v355
      %v372 = vadd.f32 %v340, %v356
      %v373 = vadd.f32 %v341, %v357
      %v374 = vadd.f32 %v358, %v359
      %v375 = vadd.f32 %v374, %v360
      %v376 = vadd.f32 %v375, %v361
      %v377 = vadd.f32 %v376, %v362
      %v378 = vadd.f32 %v377, %v363
      %v379 = vadd.f32 %v378, %v364
      %v380 = vadd.f32 %v379, %v365
      %v381 = vadd.f32 %v380, %v366
      %v382 = vadd.f32 %v381, %v367
      %v383 = vadd.f32 %v382, %v368
      %v384 = vadd.f32 %v383, %v369
      %v385 = vadd.f32 %v384, %v370
      %v386 = vadd.f32 %v385, %v371
      %v387 = vadd.f32 %v386, %v372
      %v388 = vadd.f32 %v387, %v373
      %v389 = vrot.slane %v388, 4
      %v390 = vadd.f32 %v388, %v389
      %v391 = vrot.slane %v390, 2
      %v392 = vadd.f32 %v390, %v391
      %v393 = vrot.slane %v392, 1
      %v394 = vadd.f32 %v392, %v393
      %v395 = vld [vmem:[%s6] sm:$0xff]
      %v396 = vld [vmem:[%s6 + $0x8] sm:$0xff]
      %v397 = vld [vmem:[%s6 + $0x10] sm:$0xff]
      %v398 = vld [vmem:[%s6 + $0x18] sm:$0xff]
      %v399 = vld [vmem:[%s6 + $0x20] sm:$0xff]
      %v400 = vld [vmem:[%s6 + $0x28] sm:$0xff]
      %v401 = vld [vmem:[%s6 + $0x30] sm:$0xff]
      %v402 = vld [vmem:[%s6 + $0x38] sm:$0xff]
      %v403 = vld [vmem:[%s6 + $0x40] sm:$0xff]
      %v404 = vld [vmem:[%s6 + $0x48] sm:$0xff]
      %v405 = vld [vmem:[%s6 + $0x50] sm:$0xff]
      %v406 = vld [vmem:[%s6 + $0x58] sm:$0xff]
      %v407 = vld [vmem:[%s6 + $0x60] sm:$0xff]
      %v408 = vld [vmem:[%s6 + $0x68] sm:$0xff]
      %v409 = vld [vmem:[%s6 + $0x70] sm:$0xff]
      %v410 = vld [vmem:[%s6 + $0x78] sm:$0xff]
      %v411 = vld [vmem:[%s6 + $0x80] sm:$0x1]
      %v412 = vlaneseq
      %v413 = vshrl.u32 %v412, 7
      %v414 = vsub.s32 0, %v413
      %v415 = vrot.slane %v411, %v414
      %416 = vmatprep.subr.mxu0 0.0
      %417 = vmatpush1.msra.mxu0 %v395
      %418 = vmatprep.subr.mxu0 0.0
      %419 = vmatpush1.msra.mxu0 %v396
      %420 = vmatprep.subr.mxu0 0.0
      %421 = vmatpush1.msra.mxu0 %v397
      %422 = vmatprep.subr.mxu0 0.0
      %423 = vmatpush1.msra.mxu0 %v398
      %424 = vmatprep.subr.mxu0 0.0
      %425 = vmatpush1.msra.mxu0 %v399
      %426 = vmatprep.subr.mxu0 0.0
      %427 = vmatpush1.msra.mxu0 %v400
      %428 = vmatprep.subr.mxu0 0.0
      %429 = vmatpush1.msra.mxu0 %v401
      %430 = vmatprep.subr.mxu0 0.0
      %431 = vmatpush1.msra.mxu0 %v402
      %432 = vmatprep.subr.mxu0 0.0
      %433 = vmatpush1.msra.mxu0 %v403
      %434 = vmatprep.subr.mxu0 0.0
      %435 = vmatpush1.msra.mxu0 %v404
      %436 = vmatprep.subr.mxu0 0.0
      %437 = vmatpush1.msra.mxu0 %v405
      %438 = vmatprep.subr.mxu0 0.0
      %439 = vmatpush1.msra.mxu0 %v406
      %440 = vmatprep.subr.mxu0 0.0
      %441 = vmatpush1.msra.mxu0 %v407
      %442 = vmatprep.subr.mxu0 0.0
      %443 = vmatpush1.msra.mxu0 %v408
      %444 = vmatprep.subr.mxu0 0.0
      %445 = vmatpush1.msra.mxu0 %v409
      %446 = vmatprep.subr.mxu0 0.0
      %447 = vmatpush1.msra.mxu0 %v410
      %448 = vmatprep.subr.mxu0 0.0
      %449 = vmatpush1.msra.mxu0 0.0
      %450 = vmatprep.subr.mxu0 0.0
      %451 = vmatpush1.msra.mxu0 0.0
      %452 = vmatprep.subr.mxu0 0.0
      %453 = vmatpush1.msra.mxu0 0.0
      %454 = vmatprep.subr.mxu0 0.0
      %455 = vmatpush1.msra.mxu0 0.0
      %456 = vmatprep.subr.mxu0 0.0
      %457 = vmatpush1.msra.mxu0 0.0
      %458 = vmatprep.subr.mxu0 0.0
      %459 = vmatpush1.msra.mxu0 0.0
      %460 = vmatprep.subr.mxu0 0.0
      %461 = vmatpush1.msra.mxu0 0.0
      %462 = vmatprep.subr.mxu0 0.0
      %463 = vmatpush1.msra.mxu0 0.0
      %464 = vmatprep.subr.mxu0 0.0
      %465 = vmatpush1.msra.mxu0 0.0
      %466 = vmatprep.subr.mxu0 0.0
      %467 = vmatpush1.msra.mxu0 0.0
      %468 = vmatprep.subr.mxu0 0.0
      %469 = vmatpush1.msra.mxu0 0.0
      %470 = vmatprep.subr.mxu0 0.0
      %471 = vmatpush1.msra.mxu0 0.0
      %472 = vmatprep.subr.mxu0 0.0
      %473 = vmatpush1.msra.mxu0 0.0
      %474 = vmatprep.subr.mxu0 0.0
      %475 = vmatpush1.msra.mxu0 0.0
      %476 = vmatprep.subr.mxu0 0.0
      %477 = vmatpush1.msra.mxu0 0.0
      %478 = vmatprep.subr.mxu0 0.0
      %479 = vmatpush1.msra.mxu0 0.0
      %480 = vmatprep.mubr.f32.mxu0 0.0
      %481 = vmatmul.mubr.f32.gmra.mrb[0].mxu0 %v394
      %v482 = vpop.f32.mrb[0].mxu0
      %v483 = vadd.f32 %v415, %v482
      %v484 = vpop.f32.mrb[0].mxu0
      %485 = vdwg.mxu0
      %v486 = vmax.f32 %v483, 0.0
      %v487 = vld [vmem:[%s7] sm:$0xff]
      %v488 = vld [vmem:[%s7 + $0x8] sm:$0xff]
      %v489 = vld [vmem:[%s7 + $0x10] sm:$0x1]
      %v490 = vlaneseq
      %v491 = vshrl.u32 %v490, 7
      %v492 = vsub.s32 0, %v491
      %v493 = vrot.slane %v489, %v492
      %vm494 = vcmask 130048
      %v496 = vsel %vm494, %v486, 0
      %498 = vmatprep.subr.mxu0 0.0
      %499 = vmatpush1.msra.mxu0 %v487
      %500 = vmatprep.subr.mxu0 0.0
      %501 = vmatpush1.msra.mxu0 %v488
      %502 = vmatprep.subr.mxu0 0.0
      %503 = vmatpush1.msra.mxu0 0.0
      %504 = vmatprep.subr.mxu0 0.0
      %505 = vmatpush1.msra.mxu0 0.0
      %506 = vmatprep.subr.mxu0 0.0
      %507 = vmatpush1.msra.mxu0 0.0
      %508 = vmatprep.subr.mxu0 0.0
      %509 = vmatpush1.msra.mxu0 0.0
      %510 = vmatprep.subr.mxu0 0.0
      %511 = vmatpush1.msra.mxu0 0.0
      %512 = vmatprep.subr.mxu0 0.0
      %513 = vmatpush1.msra.mxu0 0.0
      %514 = vmatprep.subr.mxu0 0.0
      %515 = vmatpush1.msra.mxu0 0.0
      %516 = vmatprep.subr.mxu0 0.0
      %517 = vmatpush1.msra.mxu0 0.0
      %518 = vmatprep.subr.mxu0 0.0
      %519 = vmatpush1.msra.mxu0 0.0
      %520 = vmatprep.subr.mxu0 0.0
      %521 = vmatpush1.msra.mxu0 0.0
      %522 = vmatprep.subr.mxu0 0.0
      %523 = vmatpush1.msra.mxu0 0.0
      %524 = vmatprep.subr.mxu0 0.0
      %525 = vmatpush1.msra.mxu0 0.0
      %526 = vmatprep.subr.mxu0 0.0
      %527 = vmatpush1.msra.mxu0 0.0
      %528 = vmatprep.subr.mxu0 0.0
      %529 = vmatpush1.msra.mxu0 0.0
      %530 = vmatprep.subr.mxu0 0.0
      %531 = vmatpush1.msra.mxu0 0.0
      %532 = vmatprep.subr.mxu0 0.0
      %533 = vmatpush1.msra.mxu0 0.0
      %534 = vmatprep.subr.mxu0 0.0
      %535 = vmatpush1.msra.mxu0 0.0
      %536 = vmatprep.subr.mxu0 0.0
      %537 = vmatpush1.msra.mxu0 0.0
      %538 = vmatprep.subr.mxu0 0.0
      %539 = vmatpush1.msra.mxu0 0.0
      %540 = vmatprep.subr.mxu0 0.0
      %541 = vmatpush1.msra.mxu0 0.0
      %542 = vmatprep.subr.mxu0 0.0
      %543 = vmatpush1.msra.mxu0 0.0
      %544 = vmatprep.subr.mxu0 0.0
      %545 = vmatpush1.msra.mxu0 0.0
      %546 = vmatprep.subr.mxu0 0.0
      %547 = vmatpush1.msra.mxu0 0.0
      %548 = vmatprep.subr.mxu0 0.0
      %549 = vmatpush1.msra.mxu0 0.0
      %550 = vmatprep.subr.mxu0 0.0
      %551 = vmatpush1.msra.mxu0 0.0
      %552 = vmatprep.subr.mxu0 0.0
      %553 = vmatpush1.msra.mxu0 0.0
      %554 = vmatprep.subr.mxu0 0.0
      %555 = vmatpush1.msra.mxu0 0.0
      %556 = vmatprep.subr.mxu0 0.0
      %557 = vmatpush1.msra.mxu0 0.0
      %558 = vmatprep.subr.mxu0 0.0
      %559 = vmatpush1.msra.mxu0 0.0
      %560 = vmatprep.subr.mxu0 0.0
      %561 = vmatpush1.msra.mxu0 0.0
      %562 = vmatprep.mubr.f32.mxu0 0.0
      %563 = vmatmul.mubr.f32.gmra.mrb[0].mxu0 %v496
      %v564 = vpop.f32.mrb[0].mxu0
      %v565 = vadd.f32 %v493, %v564
      %v566 = vpop.f32.mrb[0].mxu0
      %567 = vdwg.mxu0
      %v568 = vld [vmem:[%s2] sm:$0xff]
      %v569 = vld [vmem:[%s2 + $0x8] sm:$0xff]
      %v570 = vld [vmem:[%s2 + $0x10] sm:$0xff]
      %v571 = vld [vmem:[%s2 + $0x18] sm:$0xff]
      %v572 = vld [vmem:[%s2 + $0x20] sm:$0xff]
      %v573 = vld [vmem:[%s2 + $0x28] sm:$0xff]
      %v574 = vld [vmem:[%s2 + $0x30] sm:$0xff]
      %v575 = vld [vmem:[%s2 + $0x38] sm:$0xff]
      %v576 = vld [vmem:[%s2 + $0x40] sm:$0xff]
      %v577 = vld [vmem:[%s2 + $0x48] sm:$0xff]
      %v578 = vld [vmem:[%s2 + $0x50] sm:$0xff]
      %v579 = vld [vmem:[%s2 + $0x58] sm:$0xff]
      %v580 = vld [vmem:[%s2 + $0x60] sm:$0xff]
      %v581 = vld [vmem:[%s2 + $0x68] sm:$0xff]
      %v582 = vld [vmem:[%s2 + $0x70] sm:$0xff]
      %v583 = vld [vmem:[%s2 + $0x78] sm:$0xff]
      %v584 = vld [vmem:[%s2 + $0x80] sm:$0x1]
      %v585 = vlaneseq
      %v586 = vshrl.u32 %v585, 7
      %v587 = vsub.s32 0, %v586
      %v588 = vrot.slane %v584, %v587
      %589 = vmatprep.subr.mxu0 0.0
      %590 = vmatpush1.msra.mxu0 %v568
      %591 = vmatprep.subr.mxu0 0.0
      %592 = vmatpush1.msra.mxu0 %v569
      %593 = vmatprep.subr.mxu0 0.0
      %594 = vmatpush1.msra.mxu0 %v570
      %595 = vmatprep.subr.mxu0 0.0
      %596 = vmatpush1.msra.mxu0 %v571
      %597 = vmatprep.subr.mxu0 0.0
      %598 = vmatpush1.msra.mxu0 %v572
      %599 = vmatprep.subr.mxu0 0.0
      %600 = vmatpush1.msra.mxu0 %v573
      %601 = vmatprep.subr.mxu0 0.0
      %602 = vmatpush1.msra.mxu0 %v574
      %603 = vmatprep.subr.mxu0 0.0
      %604 = vmatpush1.msra.mxu0 %v575
      %605 = vmatprep.subr.mxu0 0.0
      %606 = vmatpush1.msra.mxu0 %v576
      %607 = vmatprep.subr.mxu0 0.0
      %608 = vmatpush1.msra.mxu0 %v577
      %609 = vmatprep.subr.mxu0 0.0
      %610 = vmatpush1.msra.mxu0 %v578
      %611 = vmatprep.subr.mxu0 0.0
      %612 = vmatpush1.msra.mxu0 %v579
      %613 = vmatprep.subr.mxu0 0.0
      %614 = vmatpush1.msra.mxu0 %v580
      %615 = vmatprep.subr.mxu0 0.0
      %616 = vmatpush1.msra.mxu0 %v581
      %617 = vmatprep.subr.mxu0 0.0
      %618 = vmatpush1.msra.mxu0 %v582
      %619 = vmatprep.subr.mxu0 0.0
      %620 = vmatpush1.msra.mxu0 %v583
      %621 = vmatprep.subr.mxu0 0.0
      %622 = vmatpush1.msra.mxu0 0.0
      %623 = vmatprep.subr.mxu0 0.0
      %624 = vmatpush1.msra.mxu0 0.0
      %625 = vmatprep.subr.mxu0 0.0
      %626 = vmatpush1.msra.mxu0 0.0
      %627 = vmatprep.subr.mxu0 0.0
      %628 = vmatpush1.msra.mxu0 0.0
      %629 = vmatprep.subr.mxu0 0.0
      %630 = vmatpush1.msra.mxu0 0.0
      %631 = vmatprep.subr.mxu0 0.0
      %632 = vmatpush1.msra.mxu0 0.0
      %633 = vmatprep.subr.mxu0 0.0
      %634 = vmatpush1.msra.mxu0 0.0
      %635 = vmatprep.subr.mxu0 0.0
      %636 = vmatpush1.msra.mxu0 0.0
      %637 = vmatprep.subr.mxu0 0.0
      %638 = vmatpush1.msra.mxu0 0.0
      %639 = vmatprep.subr.mxu0 0.0
      %640 = vmatpush1.msra.mxu0 0.0
      %641 = vmatprep.subr.mxu0 0.0
      %642 = vmatpush1.msra.mxu0 0.0
      %643 = vmatprep.subr.mxu0 0.0
      %644 = vmatpush1.msra.mxu0 0.0
      %645 = vmatprep.subr.mxu0 0.0
      %646 = vmatpush1.msra.mxu0 0.0
      %647 = vmatprep.subr.mxu0 0.0
      %648 = vmatpush1.msra.mxu0 0.0
      %649 = vmatprep.subr.mxu0 0.0
      %650 = vmatpush1.msra.mxu0 0.0
      %651 = vmatprep.subr.mxu0 0.0
      %652 = vmatpush1.msra.mxu0 0.0
      %653 = vmatprep.mubr.f32.mxu0 0.0
      %654 = vmatmul.mubr.f32.gmra.mrb[0].mxu0 %v358
      %v655 = vpop.f32.mrb[0].mxu0
      %v656 = vadd.f32 %v588, %v655
      %v657 = vpop.f32.mrb[0].mxu0
      %658 = vmatprep.mubr.f32.mxu0 0.0
      %659 = vmatmul.mubr.f32.gmra.mrb[0].mxu0 %v359
      %v660 = vpop.f32.mrb[0].mxu0
      %v661 = vadd.f32 %v588, %v660
      %v662 = vpop.f32.mrb[0].mxu0
      %663 = vmatprep.mubr.f32.mxu0 0.0
      %664 = vmatmul.mubr.f32.gmra.mrb[0].mxu0 %v360
      %v665 = vpop.f32.mrb[0].mxu0
      %v666 = vadd.f32 %v588, %v665
      %v667 = vpop.f32.mrb[0].mxu0
      %668 = vmatprep.mubr.f32.mxu0 0.0
      %669 = vmatmul.mubr.f32.gmra.mrb[0].mxu0 %v361
      %v670 = vpop.f32.mrb[0].mxu0
      %v671 = vadd.f32 %v588, %v670
      %v672 = vpop.f32.mrb[0].mxu0
      %673 = vmatprep.mubr.f32.mxu0 0.0
      %674 = vmatmul.mubr.f32.gmra.mrb[0].mxu0 %v362
      %v675 = vpop.f32.mrb[0].mxu0
      %v676 = vadd.f32 %v588, %v675
      %v677 = vpop.f32.mrb[0].mxu0
      %678 = vmatprep.mubr.f32.mxu0 0.0
      %679 = vmatmul.mubr.f32.gmra.mrb[0].mxu0 %v363
      %v680 = vpop.f32.mrb[0].mxu0
      %v681 = vadd.f32 %v588, %v680
      %v682 = vpop.f32.mrb[0].mxu0
      %683 = vmatprep.mubr.f32.mxu0 0.0
      %684 = vmatmul.mubr.f32.gmra.mrb[0].mxu0 %v364
      %v685 = vpop.f32.mrb[0].mxu0
      %v686 = vadd.f32 %v588, %v685
      %v687 = vpop.f32.mrb[0].mxu0
      %688 = vmatprep.mubr.f32.mxu0 0.0
      %689 = vmatmul.mubr.f32.gmra.mrb[0].mxu0 %v365
      %v690 = vpop.f32.mrb[0].mxu0
      %v691 = vadd.f32 %v588, %v690
      %v692 = vpop.f32.mrb[0].mxu0
      %693 = vmatprep.mubr.f32.mxu0 0.0
      %694 = vmatmul.mubr.f32.gmra.mrb[0].mxu0 %v366
      %v695 = vpop.f32.mrb[0].mxu0
      %v696 = vadd.f32 %v588, %v695
      %v697 = vpop.f32.mrb[0].mxu0
      %698 = vmatprep.mubr.f32.mxu0 0.0
      %699 = vmatmul.mubr.f32.gmra.mrb[0].mxu0 %v367
      %v700 = vpop.f32.mrb[0].mxu0
      %v701 = vadd.f32 %v588, %v700
      %v702 = vpop.f32.mrb[0].mxu0
      %703 = vmatprep.mubr.f32.mxu0 0.0
      %704 = vmatmul.mubr.f32.gmra.mrb[0].mxu0 %v368
      %v705 = vpop.f32.mrb[0].mxu0
      %v706 = vadd.f32 %v588, %v705
      %v707 = vpop.f32.mrb[0].mxu0
      %708 = vmatprep.mubr.f32.mxu0 0.0
      %709 = vmatmul.mubr.f32.gmra.mrb[0].mxu0 %v369
      %v710 = vpop.f32.mrb[0].mxu0
      %v711 = vadd.f32 %v588, %v710
      %v712 = vpop.f32.mrb[0].mxu0
      %713 = vmatprep.mubr.f32.mxu0 0.0
      %714 = vmatmul.mubr.f32.gmra.mrb[0].mxu0 %v370
      %v715 = vpop.f32.mrb[0].mxu0
      %v716 = vadd.f32 %v588, %v715
      %v717 = vpop.f32.mrb[0].mxu0
      %718 = vmatprep.mubr.f32.mxu0 0.0
      %719 = vmatmul.mubr.f32.gmra.mrb[0].mxu0 %v371
      %v720 = vpop.f32.mrb[0].mxu0
      %v721 = vadd.f32 %v588, %v720
      %v722 = vpop.f32.mrb[0].mxu0
      %723 = vmatprep.mubr.f32.mxu0 0.0
      %724 = vmatmul.mubr.f32.gmra.mrb[0].mxu0 %v372
      %v725 = vpop.f32.mrb[0].mxu0
      %v726 = vadd.f32 %v588, %v725
      %v727 = vpop.f32.mrb[0].mxu0
      %728 = vmatprep.mubr.f32.mxu0 0.0
      %729 = vmatmul.mubr.f32.gmra.mrb[0].mxu0 %v373
      %v730 = vpop.f32.mrb[0].mxu0
      %v731 = vadd.f32 %v588, %v730
      %v732 = vpop.f32.mrb[0].mxu0
      %733 = vdwg.mxu0
      %v734 = vmax.f32 %v656, 0.0
      %v735 = vmax.f32 %v661, 0.0
      %v736 = vmax.f32 %v666, 0.0
      %v737 = vmax.f32 %v671, 0.0
      %v738 = vmax.f32 %v676, 0.0
      %v739 = vmax.f32 %v681, 0.0
      %v740 = vmax.f32 %v686, 0.0
      %v741 = vmax.f32 %v691, 0.0
      %v742 = vmax.f32 %v696, 0.0
      %v743 = vmax.f32 %v701, 0.0
      %v744 = vmax.f32 %v706, 0.0
      %v745 = vmax.f32 %v711, 0.0
      %v746 = vmax.f32 %v716, 0.0
      %v747 = vmax.f32 %v721, 0.0
      %v748 = vmax.f32 %v726, 0.0
      %v749 = vmax.f32 %v731, 0.0
      %v750 = vld [vmem:[%s3] sm:$0xff]
      %v751 = vld [vmem:[%s3 + $0x8] sm:$0xff]
      %v752 = vld [vmem:[%s3 + $0x10] sm:$0xff]
      %v753 = vld [vmem:[%s3 + $0x18] sm:$0xff]
      %v754 = vld [vmem:[%s3 + $0x20] sm:$0x1]
      %v755 = vlaneseq
      %v756 = vshrl.u32 %v755, 7
      %v757 = vsub.s32 0, %v756
      %v758 = vrot.slane %v754, %v757
      %vm759 = vcmask 261120
      %v761 = vsel %vm759, %v734, 0
      %v764 = vsel %vm759, %v735, 0
      %v767 = vsel %vm759, %v736, 0
      %v770 = vsel %vm759, %v737, 0
      %v773 = vsel %vm759, %v738, 0
      %v776 = vsel %vm759, %v739, 0
      %v779 = vsel %vm759, %v740, 0
      %v782 = vsel %vm759, %v741, 0
      %v785 = vsel %vm759, %v742, 0
      %v788 = vsel %vm759, %v743, 0
      %v791 = vsel %vm759, %v744, 0
      %v794 = vsel %vm759, %v745, 0
      %v797 = vsel %vm759, %v746, 0
      %v800 = vsel %vm759, %v747, 0
      %v803 = vsel %vm759, %v748, 0
      %v806 = vsel %vm759, %v749, 0
      %808 = vmatprep.subr.mxu0 0.0
      %809 = vmatpush1.msra.mxu0 %v750
      %810 = vmatprep.subr.mxu0 0.0
      %811 = vmatpush1.msra.mxu0 %v751
      %812 = vmatprep.subr.mxu0 0.0
      %813 = vmatpush1.msra.mxu0 %v752
      %814 = vmatprep.subr.mxu0 0.0
      %815 = vmatpush1.msra.mxu0 %v753
      %816 = vmatprep.subr.mxu0 0.0
      %817 = vmatpush1.msra.mxu0 0.0
      %818 = vmatprep.subr.mxu0 0.0
      %819 = vmatpush1.msra.mxu0 0.0
      %820 = vmatprep.subr.mxu0 0.0
      %821 = vmatpush1.msra.mxu0 0.0
      %822 = vmatprep.subr.mxu0 0.0
      %823 = vmatpush1.msra.mxu0 0.0
      %824 = vmatprep.subr.mxu0 0.0
      %825 = vmatpush1.msra.mxu0 0.0
      %826 = vmatprep.subr.mxu0 0.0
      %827 = vmatpush1.msra.mxu0 0.0
      %828 = vmatprep.subr.mxu0 0.0
      %829 = vmatpush1.msra.mxu0 0.0
      %830 = vmatprep.subr.mxu0 0.0
      %831 = vmatpush1.msra.mxu0 0.0
      %832 = vmatprep.subr.mxu0 0.0
      %833 = vmatpush1.msra.mxu0 0.0
      %834 = vmatprep.subr.mxu0 0.0
      %835 = vmatpush1.msra.mxu0 0.0
      %836 = vmatprep.subr.mxu0 0.0
      %837 = vmatpush1.msra.mxu0 0.0
      %838 = vmatprep.subr.mxu0 0.0
      %839 = vmatpush1.msra.mxu0 0.0
      %840 = vmatprep.subr.mxu0 0.0
      %841 = vmatpush1.msra.mxu0 0.0
      %842 = vmatprep.subr.mxu0 0.0
      %843 = vmatpush1.msra.mxu0 0.0
      %844 = vmatprep.subr.mxu0 0.0
      %845 = vmatpush1.msra.mxu0 0.0
      %846 = vmatprep.subr.mxu0 0.0
      %847 = vmatpush1.msra.mxu0 0.0
      %848 = vmatprep.subr.mxu0 0.0
      %849 = vmatpush1.msra.mxu0 0.0
      %850 = vmatprep.subr.mxu0 0.0
      %851 = vmatpush1.msra.mxu0 0.0
      %852 = vmatprep.subr.mxu0 0.0
      %853 = vmatpush1.msra.mxu0 0.0
      %854 = vmatprep.subr.mxu0 0.0
      %855 = vmatpush1.msra.mxu0 0.0
      %856 = vmatprep.subr.mxu0 0.0
      %857 = vmatpush1.msra.mxu0 0.0
      %858 = vmatprep.subr.mxu0 0.0
      %859 = vmatpush1.msra.mxu0 0.0
      %860 = vmatprep.subr.mxu0 0.0
      %861 = vmatpush1.msra.mxu0 0.0
      %862 = vmatprep.subr.mxu0 0.0
      %863 = vmatpush1.msra.mxu0 0.0
      %864 = vmatprep.subr.mxu0 0.0
      %865 = vmatpush1.msra.mxu0 0.0
      %866 = vmatprep.subr.mxu0 0.0
      %867 = vmatpush1.msra.mxu0 0.0
      %868 = vmatprep.subr.mxu0 0.0
      %869 = vmatpush1.msra.mxu0 0.0
      %870 = vmatprep.subr.mxu0 0.0
      %871 = vmatpush1.msra.mxu0 0.0
      %872 = vmatprep.mubr.f32.mxu0 0.0
      %873 = vmatmul.mubr.f32.gmra.mrb[0].mxu0 %v761
      %v874 = vpop.f32.mrb[0].mxu0
      %v875 = vadd.f32 %v758, %v874
      %v876 = vpop.f32.mrb[0].mxu0
      %877 = vmatprep.mubr.f32.mxu0 0.0
      %878 = vmatmul.mubr.f32.gmra.mrb[0].mxu0 %v764
      %v879 = vpop.f32.mrb[0].mxu0
      %v880 = vadd.f32 %v758, %v879
      %v881 = vpop.f32.mrb[0].mxu0
      %882 = vmatprep.mubr.f32.mxu0 0.0
      %883 = vmatmul.mubr.f32.gmra.mrb[0].mxu0 %v767
      %v884 = vpop.f32.mrb[0].mxu0
      %v885 = vadd.f32 %v758, %v884
      %v886 = vpop.f32.mrb[0].mxu0
      %887 = vmatprep.mubr.f32.mxu0 0.0
      %888 = vmatmul.mubr.f32.gmra.mrb[0].mxu0 %v770
      %v889 = vpop.f32.mrb[0].mxu0
      %v890 = vadd.f32 %v758, %v889
      %v891 = vpop.f32.mrb[0].mxu0
      %892 = vmatprep.mubr.f32.mxu0 0.0
      %893 = vmatmul.mubr.f32.gmra.mrb[0].mxu0 %v773
      %v894 = vpop.f32.mrb[0].mxu0
      %v895 = vadd.f32 %v758, %v894
      %v896 = vpop.f32.mrb[0].mxu0
      %897 = vmatprep.mubr.f32.mxu0 0.0
      %898 = vmatmul.mubr.f32.gmra.mrb[0].mxu0 %v776
      %v899 = vpop.f32.mrb[0].mxu0
      %v900 = vadd.f32 %v758, %v899
      %v901 = vpop.f32.mrb[0].mxu0
      %902 = vmatprep.mubr.f32.mxu0 0.0
      %903 = vmatmul.mubr.f32.gmra.mrb[0].mxu0 %v779
      %v904 = vpop.f32.mrb[0].mxu0
      %v905 = vadd.f32 %v758, %v904
      %v906 = vpop.f32.mrb[0].mxu0
      %907 = vmatprep.mubr.f32.mxu0 0.0
      %908 = vmatmul.mubr.f32.gmra.mrb[0].mxu0 %v782
      %v909 = vpop.f32.mrb[0].mxu0
      %v910 = vadd.f32 %v758, %v909
      %v911 = vpop.f32.mrb[0].mxu0
      %912 = vmatprep.mubr.f32.mxu0 0.0
      %913 = vmatmul.mubr.f32.gmra.mrb[0].mxu0 %v785
      %v914 = vpop.f32.mrb[0].mxu0
      %v915 = vadd.f32 %v758, %v914
      %v916 = vpop.f32.mrb[0].mxu0
      %917 = vmatprep.mubr.f32.mxu0 0.0
      %918 = vmatmul.mubr.f32.gmra.mrb[0].mxu0 %v788
      %v919 = vpop.f32.mrb[0].mxu0
      %v920 = vadd.f32 %v758, %v919
      %v921 = vpop.f32.mrb[0].mxu0
      %922 = vmatprep.mubr.f32.mxu0 0.0
      %923 = vmatmul.mubr.f32.gmra.mrb[0].mxu0 %v791
      %v924 = vpop.f32.mrb[0].mxu0
      %v925 = vadd.f32 %v758, %v924
      %v926 = vpop.f32.mrb[0].mxu0
      %927 = vmatprep.mubr.f32.mxu0 0.0
      %928 = vmatmul.mubr.f32.gmra.mrb[0].mxu0 %v794
      %v929 = vpop.f32.mrb[0].mxu0
      %v930 = vadd.f32 %v758, %v929
      %v931 = vpop.f32.mrb[0].mxu0
      %932 = vmatprep.mubr.f32.mxu0 0.0
      %933 = vmatmul.mubr.f32.gmra.mrb[0].mxu0 %v797
      %v934 = vpop.f32.mrb[0].mxu0
      %v935 = vadd.f32 %v758, %v934
      %v936 = vpop.f32.mrb[0].mxu0
      %937 = vmatprep.mubr.f32.mxu0 0.0
      %938 = vmatmul.mubr.f32.gmra.mrb[0].mxu0 %v800
      %v939 = vpop.f32.mrb[0].mxu0
      %v940 = vadd.f32 %v758, %v939
      %v941 = vpop.f32.mrb[0].mxu0
      %942 = vmatprep.mubr.f32.mxu0 0.0
      %943 = vmatmul.mubr.f32.gmra.mrb[0].mxu0 %v803
      %v944 = vpop.f32.mrb[0].mxu0
      %v945 = vadd.f32 %v758, %v944
      %v946 = vpop.f32.mrb[0].mxu0
      %947 = vmatprep.mubr.f32.mxu0 0.0
      %948 = vmatmul.mubr.f32.gmra.mrb[0].mxu0 %v806
      %v949 = vpop.f32.mrb[0].mxu0
      %v950 = vadd.f32 %v758, %v949
      %v951 = vpop.f32.mrb[0].mxu0
      %952 = vdwg.mxu0
      %v953 = vlaneseq
      %v954 = vshrl.u32 %v953, 7
      %v955 = vsub.s32 0, %v954
      %v956 = vrot.slane %v565, %v955
      %v957 = vadd.f32 %v875, %v956
      %v958 = vadd.f32 %v880, %v956
      %v959 = vadd.f32 %v885, %v956
      %v960 = vadd.f32 %v890, %v956
      %v961 = vadd.f32 %v895, %v956
      %v962 = vadd.f32 %v900, %v956
      %v963 = vadd.f32 %v905, %v956
      %v964 = vadd.f32 %v910, %v956
      %v965 = vadd.f32 %v915, %v956
      %v966 = vadd.f32 %v920, %v956
      %v967 = vadd.f32 %v925, %v956
      %v968 = vadd.f32 %v930, %v956
      %v969 = vadd.f32 %v935, %v956
      %v970 = vadd.f32 %v940, %v956
      %v971 = vadd.f32 %v945, %v956
      %v972 = vadd.f32 %v950, %v956
      %v973 = vsub.f32 0.0, %v957
      %v974 = vsub.f32 0.0, %v958
      %v975 = vsub.f32 0.0, %v959
      %v976 = vsub.f32 0.0, %v960
      %v977 = vsub.f32 0.0, %v961
      %v978 = vsub.f32 0.0, %v962
      %v979 = vsub.f32 0.0, %v963
      %v980 = vsub.f32 0.0, %v964
      %v981 = vsub.f32 0.0, %v965
      %v982 = vsub.f32 0.0, %v966
      %v983 = vsub.f32 0.0, %v967
      %v984 = vsub.f32 0.0, %v968
      %v985 = vsub.f32 0.0, %v969
      %v986 = vsub.f32 0.0, %v970
      %v987 = vsub.f32 0.0, %v971
      %v988 = vsub.f32 0.0, %v972
      %v989 = vmul.f32 %v973, 1.442695
      %v990 = vpow.pop %v989
      %v991 = vmul.f32 %v974, 1.442695
      %v992 = vpow.pop %v991
      %v993 = vmul.f32 %v975, 1.442695
      %v994 = vpow.pop %v993
      %v995 = vmul.f32 %v976, 1.442695
      %v996 = vpow.pop %v995
      %v997 = vmul.f32 %v977, 1.442695
      %v998 = vpow.pop %v997
      %v999 = vmul.f32 %v978, 1.442695
      %v1000 = vpow.pop %v999
      %v1001 = vmul.f32 %v979, 1.442695
      %v1002 = vpow.pop %v1001
      %v1003 = vmul.f32 %v980, 1.442695
      %v1004 = vpow.pop %v1003
      %v1005 = vmul.f32 %v981, 1.442695
      %v1006 = vpow.pop %v1005
      %v1007 = vmul.f32 %v982, 1.442695
      %v1008 = vpow.pop %v1007
      %v1009 = vmul.f32 %v983, 1.442695
      %v1010 = vpow.pop %v1009
      %v1011 = vmul.f32 %v984, 1.442695
      %v1012 = vpow.pop %v1011
      %v1013 = vmul.f32 %v985, 1.442695
      %v1014 = vpow.pop %v1013
      %v1015 = vmul.f32 %v986, 1.442695
      %v1016 = vpow.pop %v1015
      %v1017 = vmul.f32 %v987, 1.442695
      %v1018 = vpow.pop %v1017
      %v1019 = vmul.f32 %v988, 1.442695
      %v1020 = vpow.pop %v1019
      %v1021 = vadd.f32 %v990, 1.0
      %v1022 = vadd.f32 %v992, 1.0
      %v1023 = vadd.f32 %v994, 1.0
      %v1024 = vadd.f32 %v996, 1.0
      %v1025 = vadd.f32 %v998, 1.0
      %v1026 = vadd.f32 %v1000, 1.0
      %v1027 = vadd.f32 %v1002, 1.0
      %v1028 = vadd.f32 %v1004, 1.0
      %v1029 = vadd.f32 %v1006, 1.0
      %v1030 = vadd.f32 %v1008, 1.0
      %v1031 = vadd.f32 %v1010, 1.0
      %v1032 = vadd.f32 %v1012, 1.0
      %v1033 = vadd.f32 %v1014, 1.0
      %v1034 = vadd.f32 %v1016, 1.0
      %v1035 = vadd.f32 %v1018, 1.0
      %v1036 = vadd.f32 %v1020, 1.0
      %v1037 = vrcp.pop %v1021
      %v1038 = vrcp.pop %v1022
      %v1039 = vrcp.pop %v1023
      %v1040 = vrcp.pop %v1024
      %v1041 = vrcp.pop %v1025
      %v1042 = vrcp.pop %v1026
      %v1043 = vrcp.pop %v1027
      %v1044 = vrcp.pop %v1028
      %v1045 = vrcp.pop %v1029
      %v1046 = vrcp.pop %v1030
      %v1047 = vrcp.pop %v1031
      %v1048 = vrcp.pop %v1032
      %v1049 = vrcp.pop %v1033
      %v1050 = vrcp.pop %v1034
      %v1051 = vrcp.pop %v1035
      %v1052 = vrcp.pop %v1036
      %v1053 = vsub.f32 %v326, %v342
      %v1054 = vsub.f32 %v327, %v343
      %v1055 = vsub.f32 %v328, %v344
      %v1056 = vsub.f32 %v329, %v345
      %v1057 = vsub.f32 %v330, %v346
      %v1058 = vsub.f32 %v331, %v347
      %v1059 = vsub.f32 %v332, %v348
      %v1060 = vsub.f32 %v333, %v349
      %v1061 = vsub.f32 %v334, %v350
      %v1062 = vsub.f32 %v335, %v351
      %v1063 = vsub.f32 %v336, %v352
      %v1064 = vsub.f32 %v337, %v353
      %v1065 = vsub.f32 %v338, %v354
      %v1066 = vsub.f32 %v339, %v355
      %v1067 = vsub.f32 %v340, %v356
      %v1068 = vsub.f32 %v341, %v357
      %v1069 = vmul.f32 %v1037, %v1053
      %v1070 = vmul.f32 %v1038, %v1054
      %v1071 = vmul.f32 %v1039, %v1055
      %v1072 = vmul.f32 %v1040, %v1056
      %v1073 = vmul.f32 %v1041, %v1057
      %v1074 = vmul.f32 %v1042, %v1058
      %v1075 = vmul.f32 %v1043, %v1059
      %v1076 = vmul.f32 %v1044, %v1060
      %v1077 = vmul.f32 %v1045, %v1061
      %v1078 = vmul.f32 %v1046, %v1062
      %v1079 = vmul.f32 %v1047, %v1063
      %v1080 = vmul.f32 %v1048, %v1064
      %v1081 = vmul.f32 %v1049, %v1065
      %v1082 = vmul.f32 %v1050, %v1066
      %v1083 = vmul.f32 %v1051, %v1067
      %v1084 = vmul.f32 %v1052, %v1068
      %v1085 = vadd.f32 %v342, %v1069
      %v1086 = vadd.f32 %v343, %v1070
      %v1087 = vadd.f32 %v344, %v1071
      %v1088 = vadd.f32 %v345, %v1072
      %v1089 = vadd.f32 %v346, %v1073
      %v1090 = vadd.f32 %v347, %v1074
      %v1091 = vadd.f32 %v348, %v1075
      %v1092 = vadd.f32 %v349, %v1076
      %v1093 = vadd.f32 %v350, %v1077
      %v1094 = vadd.f32 %v351, %v1078
      %v1095 = vadd.f32 %v352, %v1079
      %v1096 = vadd.f32 %v353, %v1080
      %v1097 = vadd.f32 %v354, %v1081
      %v1098 = vadd.f32 %v355, %v1082
      %v1099 = vadd.f32 %v356, %v1083
      %v1100 = vadd.f32 %v357, %v1084
      %v1101 = vadd.f32 %v1085, %v1086
      %v1102 = vadd.f32 %v1101, %v1087
      %v1103 = vadd.f32 %v1102, %v1088
      %v1104 = vadd.f32 %v1103, %v1089
      %v1105 = vadd.f32 %v1104, %v1090
      %v1106 = vadd.f32 %v1105, %v1091
      %v1107 = vadd.f32 %v1106, %v1092
      %v1108 = vadd.f32 %v1107, %v1093
      %v1109 = vadd.f32 %v1108, %v1094
      %v1110 = vadd.f32 %v1109, %v1095
      %v1111 = vadd.f32 %v1110, %v1096
      %v1112 = vadd.f32 %v1111, %v1097
      %v1113 = vadd.f32 %v1112, %v1098
      %v1114 = vadd.f32 %v1113, %v1099
      %v1115 = vadd.f32 %v1114, %v1100
      %v1116 = vrot.slane %v1115, 4
      %v1117 = vadd.f32 %v1115, %v1116
      %v1118 = vrot.slane %v1117, 2
      %v1119 = vadd.f32 %v1117, %v1118
      %v1120 = vrot.slane %v1119, 1
      %v1121 = vadd.f32 %v1119, %v1120
      %1122 = vmatprep.subr.mxu0 0.0
      %1123 = vmatpush1.msra.mxu0 %v395
      %1124 = vmatprep.subr.mxu0 0.0
      %1125 = vmatpush1.msra.mxu0 %v396
      %1126 = vmatprep.subr.mxu0 0.0
      %1127 = vmatpush1.msra.mxu0 %v397
      %1128 = vmatprep.subr.mxu0 0.0
      %1129 = vmatpush1.msra.mxu0 %v398
      %1130 = vmatprep.subr.mxu0 0.0
      %1131 = vmatpush1.msra.mxu0 %v399
      %1132 = vmatprep.subr.mxu0 0.0
      %1133 = vmatpush1.msra.mxu0 %v400
      %1134 = vmatprep.subr.mxu0 0.0
      %1135 = vmatpush1.msra.mxu0 %v401
      %1136 = vmatprep.subr.mxu0 0.0
      %1137 = vmatpush1.msra.mxu0 %v402
      %1138 = vmatprep.subr.mxu0 0.0
      %1139 = vmatpush1.msra.mxu0 %v403
      %1140 = vmatprep.subr.mxu0 0.0
      %1141 = vmatpush1.msra.mxu0 %v404
      %1142 = vmatprep.subr.mxu0 0.0
      %1143 = vmatpush1.msra.mxu0 %v405
      %1144 = vmatprep.subr.mxu0 0.0
      %1145 = vmatpush1.msra.mxu0 %v406
      %1146 = vmatprep.subr.mxu0 0.0
      %1147 = vmatpush1.msra.mxu0 %v407
      %1148 = vmatprep.subr.mxu0 0.0
      %1149 = vmatpush1.msra.mxu0 %v408
      %1150 = vmatprep.subr.mxu0 0.0
      %1151 = vmatpush1.msra.mxu0 %v409
      %1152 = vmatprep.subr.mxu0 0.0
      %1153 = vmatpush1.msra.mxu0 %v410
      %1154 = vmatprep.subr.mxu0 0.0
      %1155 = vmatpush1.msra.mxu0 0.0
      %1156 = vmatprep.subr.mxu0 0.0
      %1157 = vmatpush1.msra.mxu0 0.0
      %1158 = vmatprep.subr.mxu0 0.0
      %1159 = vmatpush1.msra.mxu0 0.0
      %1160 = vmatprep.subr.mxu0 0.0
      %1161 = vmatpush1.msra.mxu0 0.0
      %1162 = vmatprep.subr.mxu0 0.0
      %1163 = vmatpush1.msra.mxu0 0.0
      %1164 = vmatprep.subr.mxu0 0.0
      %1165 = vmatpush1.msra.mxu0 0.0
      %1166 = vmatprep.subr.mxu0 0.0
      %1167 = vmatpush1.msra.mxu0 0.0
      %1168 = vmatprep.subr.mxu0 0.0
      %1169 = vmatpush1.msra.mxu0 0.0
      %1170 = vmatprep.subr.mxu0 0.0
      %1171 = vmatpush1.msra.mxu0 0.0
      %1172 = vmatprep.subr.mxu0 0.0
      %1173 = vmatpush1.msra.mxu0 0.0
      %1174 = vmatprep.subr.mxu0 0.0
      %1175 = vmatpush1.msra.mxu0 0.0
      %1176 = vmatprep.subr.mxu0 0.0
      %1177 = vmatpush1.msra.mxu0 0.0
      %1178 = vmatprep.subr.mxu0 0.0
      %1179 = vmatpush1.msra.mxu0 0.0
      %1180 = vmatprep.subr.mxu0 0.0
      %1181 = vmatpush1.msra.mxu0 0.0
      %1182 = vmatprep.subr.mxu0 0.0
      %1183 = vmatpush1.msra.mxu0 0.0
      %1184 = vmatprep.subr.mxu0 0.0
      %1185 = vmatpush1.msra.mxu0 0.0
      %1186 = vmatprep.mubr.f32.mxu0 0.0
      %1187 = vmatmul.mubr.f32.gmra.mrb[0].mxu0 %v1121
      %v1188 = vpop.f32.mrb[0].mxu0
      %v1189 = vadd.f32 %v415, %v1188
      %v1190 = vpop.f32.mrb[0].mxu0
      %1191 = vdwg.mxu0
      %v1192 = vmax.f32 %v1189, 0.0
      %v1194 = vsel %vm494, %v1192, 0
      %1196 = vmatprep.subr.mxu0 0.0
      %1197 = vmatpush1.msra.mxu0 %v487
      %1198 = vmatprep.subr.mxu0 0.0
      %1199 = vmatpush1.msra.mxu0 %v488
      %1200 = vmatprep.subr.mxu0 0.0
      %1201 = vmatpush1.msra.mxu0 0.0
      %1202 = vmatprep.subr.mxu0 0.0
      %1203 = vmatpush1.msra.mxu0 0.0
      %1204 = vmatprep.subr.mxu0 0.0
      %1205 = vmatpush1.msra.mxu0 0.0
      %1206 = vmatprep.subr.mxu0 0.0
      %1207 = vmatpush1.msra.mxu0 0.0
      %1208 = vmatprep.subr.mxu0 0.0
      %1209 = vmatpush1.msra.mxu0 0.0
      %1210 = vmatprep.subr.mxu0 0.0
      %1211 = vmatpush1.msra.mxu0 0.0
      %1212 = vmatprep.subr.mxu0 0.0
      %1213 = vmatpush1.msra.mxu0 0.0
      %1214 = vmatprep.subr.mxu0 0.0
      %1215 = vmatpush1.msra.mxu0 0.0
      %1216 = vmatprep.subr.mxu0 0.0
      %1217 = vmatpush1.msra.mxu0 0.0
      %1218 = vmatprep.subr.mxu0 0.0
      %1219 = vmatpush1.msra.mxu0 0.0
      %1220 = vmatprep.subr.mxu0 0.0
      %1221 = vmatpush1.msra.mxu0 0.0
      %1222 = vmatprep.subr.mxu0 0.0
      %1223 = vmatpush1.msra.mxu0 0.0
      %1224 = vmatprep.subr.mxu0 0.0
      %1225 = vmatpush1.msra.mxu0 0.0
      %1226 = vmatprep.subr.mxu0 0.0
      %1227 = vmatpush1.msra.mxu0 0.0
      %1228 = vmatprep.subr.mxu0 0.0
      %1229 = vmatpush1.msra.mxu0 0.0
      %1230 = vmatprep.subr.mxu0 0.0
      %1231 = vmatpush1.msra.mxu0 0.0
      %1232 = vmatprep.subr.mxu0 0.0
      %1233 = vmatpush1.msra.mxu0 0.0
      %1234 = vmatprep.subr.mxu0 0.0
      %1235 = vmatpush1.msra.mxu0 0.0
      %1236 = vmatprep.subr.mxu0 0.0
      %1237 = vmatpush1.msra.mxu0 0.0
      %1238 = vmatprep.subr.mxu0 0.0
      %1239 = vmatpush1.msra.mxu0 0.0
      %1240 = vmatprep.subr.mxu0 0.0
      %1241 = vmatpush1.msra.mxu0 0.0
      %1242 = vmatprep.subr.mxu0 0.0
      %1243 = vmatpush1.msra.mxu0 0.0
      %1244 = vmatprep.subr.mxu0 0.0
      %1245 = vmatpush1.msra.mxu0 0.0
      %1246 = vmatprep.subr.mxu0 0.0
      %1247 = vmatpush1.msra.mxu0 0.0
      %1248 = vmatprep.subr.mxu0 0.0
      %1249 = vmatpush1.msra.mxu0 0.0
      %1250 = vmatprep.subr.mxu0 0.0
      %1251 = vmatpush1.msra.mxu0 0.0
      %1252 = vmatprep.subr.mxu0 0.0
      %1253 = vmatpush1.msra.mxu0 0.0
      %1254 = vmatprep.subr.mxu0 0.0
      %1255 = vmatpush1.msra.mxu0 0.0
      %1256 = vmatprep.subr.mxu0 0.0
      %1257 = vmatpush1.msra.mxu0 0.0
      %1258 = vmatprep.subr.mxu0 0.0
      %1259 = vmatpush1.msra.mxu0 0.0
      %1260 = vmatprep.mubr.f32.mxu0 0.0
      %1261 = vmatmul.mubr.f32.gmra.mrb[0].mxu0 %v1194
      %v1262 = vpop.f32.mrb[0].mxu0
      %v1263 = vadd.f32 %v493, %v1262
      %v1264 = vpop.f32.mrb[0].mxu0
      %1265 = vdwg.mxu0
      %v1266 = vld [vmem:[%s4] sm:$0xff]
      %v1267 = vld [vmem:[%s4 + $0x8] sm:$0xff]
      %v1268 = vld [vmem:[%s4 + $0x10] sm:$0xff]
      %v1269 = vld [vmem:[%s4 + $0x18] sm:$0xff]
      %v1270 = vld [vmem:[%s4 + $0x20] sm:$0xff]
      %v1271 = vld [vmem:[%s4 + $0x28] sm:$0xff]
      %v1272 = vld [vmem:[%s4 + $0x30] sm:$0xff]
      %v1273 = vld [vmem:[%s4 + $0x38] sm:$0xff]
      %v1274 = vld [vmem:[%s4 + $0x40] sm:$0xff]
      %v1275 = vld [vmem:[%s4 + $0x48] sm:$0xff]
      %v1276 = vld [vmem:[%s4 + $0x50] sm:$0xff]
      %v1277 = vld [vmem:[%s4 + $0x58] sm:$0xff]
      %v1278 = vld [vmem:[%s4 + $0x60] sm:$0xff]
      %v1279 = vld [vmem:[%s4 + $0x68] sm:$0xff]
      %v1280 = vld [vmem:[%s4 + $0x70] sm:$0xff]
      %v1281 = vld [vmem:[%s4 + $0x78] sm:$0xff]
      %v1282 = vld [vmem:[%s4 + $0x80] sm:$0x1]
      %v1283 = vlaneseq
      %v1284 = vshrl.u32 %v1283, 7
      %v1285 = vsub.s32 0, %v1284
      %v1286 = vrot.slane %v1282, %v1285
      %1287 = vmatprep.subr.mxu0 0.0
      %1288 = vmatpush1.msra.mxu0 %v1266
      %1289 = vmatprep.subr.mxu0 0.0
      %1290 = vmatpush1.msra.mxu0 %v1267
      %1291 = vmatprep.subr.mxu0 0.0
      %1292 = vmatpush1.msra.mxu0 %v1268
      %1293 = vmatprep.subr.mxu0 0.0
      %1294 = vmatpush1.msra.mxu0 %v1269
      %1295 = vmatprep.subr.mxu0 0.0
      %1296 = vmatpush1.msra.mxu0 %v1270
      %1297 = vmatprep.subr.mxu0 0.0
      %1298 = vmatpush1.msra.mxu0 %v1271
      %1299 = vmatprep.subr.mxu0 0.0
      %1300 = vmatpush1.msra.mxu0 %v1272
      %1301 = vmatprep.subr.mxu0 0.0
      %1302 = vmatpush1.msra.mxu0 %v1273
      %1303 = vmatprep.subr.mxu0 0.0
      %1304 = vmatpush1.msra.mxu0 %v1274
      %1305 = vmatprep.subr.mxu0 0.0
      %1306 = vmatpush1.msra.mxu0 %v1275
      %1307 = vmatprep.subr.mxu0 0.0
      %1308 = vmatpush1.msra.mxu0 %v1276
      %1309 = vmatprep.subr.mxu0 0.0
      %1310 = vmatpush1.msra.mxu0 %v1277
      %1311 = vmatprep.subr.mxu0 0.0
      %1312 = vmatpush1.msra.mxu0 %v1278
      %1313 = vmatprep.subr.mxu0 0.0
      %1314 = vmatpush1.msra.mxu0 %v1279
      %1315 = vmatprep.subr.mxu0 0.0
      %1316 = vmatpush1.msra.mxu0 %v1280
      %1317 = vmatprep.subr.mxu0 0.0
      %1318 = vmatpush1.msra.mxu0 %v1281
      %1319 = vmatprep.subr.mxu0 0.0
      %1320 = vmatpush1.msra.mxu0 0.0
      %1321 = vmatprep.subr.mxu0 0.0
      %1322 = vmatpush1.msra.mxu0 0.0
      %1323 = vmatprep.subr.mxu0 0.0
      %1324 = vmatpush1.msra.mxu0 0.0
      %1325 = vmatprep.subr.mxu0 0.0
      %1326 = vmatpush1.msra.mxu0 0.0
      %1327 = vmatprep.subr.mxu0 0.0
      %1328 = vmatpush1.msra.mxu0 0.0
      %1329 = vmatprep.subr.mxu0 0.0
      %1330 = vmatpush1.msra.mxu0 0.0
      %1331 = vmatprep.subr.mxu0 0.0
      %1332 = vmatpush1.msra.mxu0 0.0
      %1333 = vmatprep.subr.mxu0 0.0
      %1334 = vmatpush1.msra.mxu0 0.0
      %1335 = vmatprep.subr.mxu0 0.0
      %1336 = vmatpush1.msra.mxu0 0.0
      %1337 = vmatprep.subr.mxu0 0.0
      %1338 = vmatpush1.msra.mxu0 0.0
      %1339 = vmatprep.subr.mxu0 0.0
      %1340 = vmatpush1.msra.mxu0 0.0
      %1341 = vmatprep.subr.mxu0 0.0
      %1342 = vmatpush1.msra.mxu0 0.0
      %1343 = vmatprep.subr.mxu0 0.0
      %1344 = vmatpush1.msra.mxu0 0.0
      %1345 = vmatprep.subr.mxu0 0.0
      %1346 = vmatpush1.msra.mxu0 0.0
      %1347 = vmatprep.subr.mxu0 0.0
      %1348 = vmatpush1.msra.mxu0 0.0
      %1349 = vmatprep.subr.mxu0 0.0
      %1350 = vmatpush1.msra.mxu0 0.0
      %1351 = vmatprep.mubr.f32.mxu0 0.0
      %1352 = vmatmul.mubr.f32.gmra.mrb[0].mxu0 %v1085
      %v1353 = vpop.f32.mrb[0].mxu0
      %v1354 = vadd.f32 %v1286, %v1353
      %v1355 = vpop.f32.mrb[0].mxu0
      %1356 = vmatprep.mubr.f32.mxu0 0.0
      %1357 = vmatmul.mubr.f32.gmra.mrb[0].mxu0 %v1086
      %v1358 = vpop.f32.mrb[0].mxu0
      %v1359 = vadd.f32 %v1286, %v1358
      %v1360 = vpop.f32.mrb[0].mxu0
      %1361 = vmatprep.mubr.f32.mxu0 0.0
      %1362 = vmatmul.mubr.f32.gmra.mrb[0].mxu0 %v1087
      %v1363 = vpop.f32.mrb[0].mxu0
      %v1364 = vadd.f32 %v1286, %v1363
      %v1365 = vpop.f32.mrb[0].mxu0
      %1366 = vmatprep.mubr.f32.mxu0 0.0
      %1367 = vmatmul.mubr.f32.gmra.mrb[0].mxu0 %v1088
      %v1368 = vpop.f32.mrb[0].mxu0
      %v1369 = vadd.f32 %v1286, %v1368
      %v1370 = vpop.f32.mrb[0].mxu0
      %1371 = vmatprep.mubr.f32.mxu0 0.0
      %1372 = vmatmul.mubr.f32.gmra.mrb[0].mxu0 %v1089
      %v1373 = vpop.f32.mrb[0].mxu0
      %v1374 = vadd.f32 %v1286, %v1373
      %v1375 = vpop.f32.mrb[0].mxu0
      %1376 = vmatprep.mubr.f32.mxu0 0.0
      %1377 = vmatmul.mubr.f32.gmra.mrb[0].mxu0 %v1090
      %v1378 = vpop.f32.mrb[0].mxu0
      %v1379 = vadd.f32 %v1286, %v1378
      %v1380 = vpop.f32.mrb[0].mxu0
      %1381 = vmatprep.mubr.f32.mxu0 0.0
      %1382 = vmatmul.mubr.f32.gmra.mrb[0].mxu0 %v1091
      %v1383 = vpop.f32.mrb[0].mxu0
      %v1384 = vadd.f32 %v1286, %v1383
      %v1385 = vpop.f32.mrb[0].mxu0
      %1386 = vmatprep.mubr.f32.mxu0 0.0
      %1387 = vmatmul.mubr.f32.gmra.mrb[0].mxu0 %v1092
      %v1388 = vpop.f32.mrb[0].mxu0
      %v1389 = vadd.f32 %v1286, %v1388
      %v1390 = vpop.f32.mrb[0].mxu0
      %1391 = vmatprep.mubr.f32.mxu0 0.0
      %1392 = vmatmul.mubr.f32.gmra.mrb[0].mxu0 %v1093
      %v1393 = vpop.f32.mrb[0].mxu0
      %v1394 = vadd.f32 %v1286, %v1393
      %v1395 = vpop.f32.mrb[0].mxu0
      %1396 = vmatprep.mubr.f32.mxu0 0.0
      %1397 = vmatmul.mubr.f32.gmra.mrb[0].mxu0 %v1094
      %v1398 = vpop.f32.mrb[0].mxu0
      %v1399 = vadd.f32 %v1286, %v1398
      %v1400 = vpop.f32.mrb[0].mxu0
      %1401 = vmatprep.mubr.f32.mxu0 0.0
      %1402 = vmatmul.mubr.f32.gmra.mrb[0].mxu0 %v1095
      %v1403 = vpop.f32.mrb[0].mxu0
      %v1404 = vadd.f32 %v1286, %v1403
      %v1405 = vpop.f32.mrb[0].mxu0
      %1406 = vmatprep.mubr.f32.mxu0 0.0
      %1407 = vmatmul.mubr.f32.gmra.mrb[0].mxu0 %v1096
      %v1408 = vpop.f32.mrb[0].mxu0
      %v1409 = vadd.f32 %v1286, %v1408
      %v1410 = vpop.f32.mrb[0].mxu0
      %1411 = vmatprep.mubr.f32.mxu0 0.0
      %1412 = vmatmul.mubr.f32.gmra.mrb[0].mxu0 %v1097
      %v1413 = vpop.f32.mrb[0].mxu0
      %v1414 = vadd.f32 %v1286, %v1413
      %v1415 = vpop.f32.mrb[0].mxu0
      %1416 = vmatprep.mubr.f32.mxu0 0.0
      %1417 = vmatmul.mubr.f32.gmra.mrb[0].mxu0 %v1098
      %v1418 = vpop.f32.mrb[0].mxu0
      %v1419 = vadd.f32 %v1286, %v1418
      %v1420 = vpop.f32.mrb[0].mxu0
      %1421 = vmatprep.mubr.f32.mxu0 0.0
      %1422 = vmatmul.mubr.f32.gmra.mrb[0].mxu0 %v1099
      %v1423 = vpop.f32.mrb[0].mxu0
      %v1424 = vadd.f32 %v1286, %v1423
      %v1425 = vpop.f32.mrb[0].mxu0
      %1426 = vmatprep.mubr.f32.mxu0 0.0
      %1427 = vmatmul.mubr.f32.gmra.mrb[0].mxu0 %v1100
      %v1428 = vpop.f32.mrb[0].mxu0
      %v1429 = vadd.f32 %v1286, %v1428
      %v1430 = vpop.f32.mrb[0].mxu0
      %1431 = vdwg.mxu0
      %v1432 = vmax.f32 %v1354, 0.0
      %v1433 = vmax.f32 %v1359, 0.0
      %v1434 = vmax.f32 %v1364, 0.0
      %v1435 = vmax.f32 %v1369, 0.0
      %v1436 = vmax.f32 %v1374, 0.0
      %v1437 = vmax.f32 %v1379, 0.0
      %v1438 = vmax.f32 %v1384, 0.0
      %v1439 = vmax.f32 %v1389, 0.0
      %v1440 = vmax.f32 %v1394, 0.0
      %v1441 = vmax.f32 %v1399, 0.0
      %v1442 = vmax.f32 %v1404, 0.0
      %v1443 = vmax.f32 %v1409, 0.0
      %v1444 = vmax.f32 %v1414, 0.0
      %v1445 = vmax.f32 %v1419, 0.0
      %v1446 = vmax.f32 %v1424, 0.0
      %v1447 = vmax.f32 %v1429, 0.0
      %v1448 = vld [vmem:[%s5] sm:$0xff]
      %v1449 = vld [vmem:[%s5 + $0x8] sm:$0xff]
      %v1450 = vld [vmem:[%s5 + $0x10] sm:$0xff]
      %v1451 = vld [vmem:[%s5 + $0x18] sm:$0xff]
      %v1452 = vld [vmem:[%s5 + $0x20] sm:$0x1]
      %v1453 = vlaneseq
      %v1454 = vshrl.u32 %v1453, 7
      %v1455 = vsub.s32 0, %v1454
      %v1456 = vrot.slane %v1452, %v1455
      %v1458 = vsel %vm759, %v1432, 0
      %v1461 = vsel %vm759, %v1433, 0
      %v1464 = vsel %vm759, %v1434, 0
      %v1467 = vsel %vm759, %v1435, 0
      %v1470 = vsel %vm759, %v1436, 0
      %v1473 = vsel %vm759, %v1437, 0
      %v1476 = vsel %vm759, %v1438, 0
      %v1479 = vsel %vm759, %v1439, 0
      %v1482 = vsel %vm759, %v1440, 0
      %v1485 = vsel %vm759, %v1441, 0
      %v1488 = vsel %vm759, %v1442, 0
      %v1491 = vsel %vm759, %v1443, 0
      %v1494 = vsel %vm759, %v1444, 0
      %v1497 = vsel %vm759, %v1445, 0
      %v1500 = vsel %vm759, %v1446, 0
      %v1503 = vsel %vm759, %v1447, 0
      %1505 = vmatprep.subr.mxu0 0.0
      %1506 = vmatpush1.msra.mxu0 %v1448
      %1507 = vmatprep.subr.mxu0 0.0
      %1508 = vmatpush1.msra.mxu0 %v1449
      %1509 = vmatprep.subr.mxu0 0.0
      %1510 = vmatpush1.msra.mxu0 %v1450
      %1511 = vmatprep.subr.mxu0 0.0
      %1512 = vmatpush1.msra.mxu0 %v1451
      %1513 = vmatprep.subr.mxu0 0.0
      %1514 = vmatpush1.msra.mxu0 0.0
      %1515 = vmatprep.subr.mxu0 0.0
      %1516 = vmatpush1.msra.mxu0 0.0
      %1517 = vmatprep.subr.mxu0 0.0
      %1518 = vmatpush1.msra.mxu0 0.0
      %1519 = vmatprep.subr.mxu0 0.0
      %1520 = vmatpush1.msra.mxu0 0.0
      %1521 = vmatprep.subr.mxu0 0.0
      %1522 = vmatpush1.msra.mxu0 0.0
      %1523 = vmatprep.subr.mxu0 0.0
      %1524 = vmatpush1.msra.mxu0 0.0
      %1525 = vmatprep.subr.mxu0 0.0
      %1526 = vmatpush1.msra.mxu0 0.0
      %1527 = vmatprep.subr.mxu0 0.0
      %1528 = vmatpush1.msra.mxu0 0.0
      %1529 = vmatprep.subr.mxu0 0.0
      %1530 = vmatpush1.msra.mxu0 0.0
      %1531 = vmatprep.subr.mxu0 0.0
      %1532 = vmatpush1.msra.mxu0 0.0
      %1533 = vmatprep.subr.mxu0 0.0
      %1534 = vmatpush1.msra.mxu0 0.0
      %1535 = vmatprep.subr.mxu0 0.0
      %1536 = vmatpush1.msra.mxu0 0.0
      %1537 = vmatprep.subr.mxu0 0.0
      %1538 = vmatpush1.msra.mxu0 0.0
      %1539 = vmatprep.subr.mxu0 0.0
      %1540 = vmatpush1.msra.mxu0 0.0
      %1541 = vmatprep.subr.mxu0 0.0
      %1542 = vmatpush1.msra.mxu0 0.0
      %1543 = vmatprep.subr.mxu0 0.0
      %1544 = vmatpush1.msra.mxu0 0.0
      %1545 = vmatprep.subr.mxu0 0.0
      %1546 = vmatpush1.msra.mxu0 0.0
      %1547 = vmatprep.subr.mxu0 0.0
      %1548 = vmatpush1.msra.mxu0 0.0
      %1549 = vmatprep.subr.mxu0 0.0
      %1550 = vmatpush1.msra.mxu0 0.0
      %1551 = vmatprep.subr.mxu0 0.0
      %1552 = vmatpush1.msra.mxu0 0.0
      %1553 = vmatprep.subr.mxu0 0.0
      %1554 = vmatpush1.msra.mxu0 0.0
      %1555 = vmatprep.subr.mxu0 0.0
      %1556 = vmatpush1.msra.mxu0 0.0
      %1557 = vmatprep.subr.mxu0 0.0
      %1558 = vmatpush1.msra.mxu0 0.0
      %1559 = vmatprep.subr.mxu0 0.0
      %1560 = vmatpush1.msra.mxu0 0.0
      %1561 = vmatprep.subr.mxu0 0.0
      %1562 = vmatpush1.msra.mxu0 0.0
      %1563 = vmatprep.subr.mxu0 0.0
      %1564 = vmatpush1.msra.mxu0 0.0
      %1565 = vmatprep.subr.mxu0 0.0
      %1566 = vmatpush1.msra.mxu0 0.0
      %1567 = vmatprep.subr.mxu0 0.0
      %1568 = vmatpush1.msra.mxu0 0.0
      %1569 = vmatprep.mubr.f32.mxu0 0.0
      %1570 = vmatmul.mubr.f32.gmra.mrb[0].mxu0 %v1458
      %v1571 = vpop.f32.mrb[0].mxu0
      %v1572 = vadd.f32 %v1456, %v1571
      %v1573 = vpop.f32.mrb[0].mxu0
      %1574 = vmatprep.mubr.f32.mxu0 0.0
      %1575 = vmatmul.mubr.f32.gmra.mrb[0].mxu0 %v1461
      %v1576 = vpop.f32.mrb[0].mxu0
      %v1577 = vadd.f32 %v1456, %v1576
      %v1578 = vpop.f32.mrb[0].mxu0
      %1579 = vmatprep.mubr.f32.mxu0 0.0
      %1580 = vmatmul.mubr.f32.gmra.mrb[0].mxu0 %v1464
      %v1581 = vpop.f32.mrb[0].mxu0
      %v1582 = vadd.f32 %v1456, %v1581
      %v1583 = vpop.f32.mrb[0].mxu0
      %1584 = vmatprep.mubr.f32.mxu0 0.0
      %1585 = vmatmul.mubr.f32.gmra.mrb[0].mxu0 %v1467
      %v1586 = vpop.f32.mrb[0].mxu0
      %v1587 = vadd.f32 %v1456, %v1586
      %v1588 = vpop.f32.mrb[0].mxu0
      %1589 = vmatprep.mubr.f32.mxu0 0.0
      %1590 = vmatmul.mubr.f32.gmra.mrb[0].mxu0 %v1470
      %v1591 = vpop.f32.mrb[0].mxu0
      %v1592 = vadd.f32 %v1456, %v1591
      %v1593 = vpop.f32.mrb[0].mxu0
      %1594 = vmatprep.mubr.f32.mxu0 0.0
      %1595 = vmatmul.mubr.f32.gmra.mrb[0].mxu0 %v1473
      %v1596 = vpop.f32.mrb[0].mxu0
      %v1597 = vadd.f32 %v1456, %v1596
      %v1598 = vpop.f32.mrb[0].mxu0
      %1599 = vmatprep.mubr.f32.mxu0 0.0
      %1600 = vmatmul.mubr.f32.gmra.mrb[0].mxu0 %v1476
      %v1601 = vpop.f32.mrb[0].mxu0
      %v1602 = vadd.f32 %v1456, %v1601
      %v1603 = vpop.f32.mrb[0].mxu0
      %1604 = vmatprep.mubr.f32.mxu0 0.0
      %1605 = vmatmul.mubr.f32.gmra.mrb[0].mxu0 %v1479
      %v1606 = vpop.f32.mrb[0].mxu0
      %v1607 = vadd.f32 %v1456, %v1606
      %v1608 = vpop.f32.mrb[0].mxu0
      %1609 = vmatprep.mubr.f32.mxu0 0.0
      %1610 = vmatmul.mubr.f32.gmra.mrb[0].mxu0 %v1482
      %v1611 = vpop.f32.mrb[0].mxu0
      %v1612 = vadd.f32 %v1456, %v1611
      %v1613 = vpop.f32.mrb[0].mxu0
      %1614 = vmatprep.mubr.f32.mxu0 0.0
      %1615 = vmatmul.mubr.f32.gmra.mrb[0].mxu0 %v1485
      %v1616 = vpop.f32.mrb[0].mxu0
      %v1617 = vadd.f32 %v1456, %v1616
      %v1618 = vpop.f32.mrb[0].mxu0
      %1619 = vmatprep.mubr.f32.mxu0 0.0
      %1620 = vmatmul.mubr.f32.gmra.mrb[0].mxu0 %v1488
      %v1621 = vpop.f32.mrb[0].mxu0
      %v1622 = vadd.f32 %v1456, %v1621
      %v1623 = vpop.f32.mrb[0].mxu0
      %1624 = vmatprep.mubr.f32.mxu0 0.0
      %1625 = vmatmul.mubr.f32.gmra.mrb[0].mxu0 %v1491
      %v1626 = vpop.f32.mrb[0].mxu0
      %v1627 = vadd.f32 %v1456, %v1626
      %v1628 = vpop.f32.mrb[0].mxu0
      %1629 = vmatprep.mubr.f32.mxu0 0.0
      %1630 = vmatmul.mubr.f32.gmra.mrb[0].mxu0 %v1494
      %v1631 = vpop.f32.mrb[0].mxu0
      %v1632 = vadd.f32 %v1456, %v1631
      %v1633 = vpop.f32.mrb[0].mxu0
      %1634 = vmatprep.mubr.f32.mxu0 0.0
      %1635 = vmatmul.mubr.f32.gmra.mrb[0].mxu0 %v1497
      %v1636 = vpop.f32.mrb[0].mxu0
      %v1637 = vadd.f32 %v1456, %v1636
      %v1638 = vpop.f32.mrb[0].mxu0
      %1639 = vmatprep.mubr.f32.mxu0 0.0
      %1640 = vmatmul.mubr.f32.gmra.mrb[0].mxu0 %v1500
      %v1641 = vpop.f32.mrb[0].mxu0
      %v1642 = vadd.f32 %v1456, %v1641
      %v1643 = vpop.f32.mrb[0].mxu0
      %1644 = vmatprep.mubr.f32.mxu0 0.0
      %1645 = vmatmul.mubr.f32.gmra.mrb[0].mxu0 %v1503
      %v1646 = vpop.f32.mrb[0].mxu0
      %v1647 = vadd.f32 %v1456, %v1646
      %v1648 = vpop.f32.mrb[0].mxu0
      %1649 = vdwg.mxu0
      %v1650 = vlaneseq
      %v1651 = vshrl.u32 %v1650, 7
      %v1652 = vsub.s32 0, %v1651
      %v1653 = vrot.slane %v1263, %v1652
      %v1654 = vadd.f32 %v1572, %v1653
      %v1655 = vadd.f32 %v1577, %v1653
      %v1656 = vadd.f32 %v1582, %v1653
      %v1657 = vadd.f32 %v1587, %v1653
      %v1658 = vadd.f32 %v1592, %v1653
      %v1659 = vadd.f32 %v1597, %v1653
      %v1660 = vadd.f32 %v1602, %v1653
      %v1661 = vadd.f32 %v1607, %v1653
      %v1662 = vadd.f32 %v1612, %v1653
      %v1663 = vadd.f32 %v1617, %v1653
      %v1664 = vadd.f32 %v1622, %v1653
      %v1665 = vadd.f32 %v1627, %v1653
      %v1666 = vadd.f32 %v1632, %v1653
      %v1667 = vadd.f32 %v1637, %v1653
      %v1668 = vadd.f32 %v1642, %v1653
      %v1669 = vadd.f32 %v1647, %v1653
      %v1670 = vsub.f32 0.0, %v1654
      %v1671 = vsub.f32 0.0, %v1655
      %v1672 = vsub.f32 0.0, %v1656
      %v1673 = vsub.f32 0.0, %v1657
      %v1674 = vsub.f32 0.0, %v1658
      %v1675 = vsub.f32 0.0, %v1659
      %v1676 = vsub.f32 0.0, %v1660
      %v1677 = vsub.f32 0.0, %v1661
      %v1678 = vsub.f32 0.0, %v1662
      %v1679 = vsub.f32 0.0, %v1663
      %v1680 = vsub.f32 0.0, %v1664
      %v1681 = vsub.f32 0.0, %v1665
      %v1682 = vsub.f32 0.0, %v1666
      %v1683 = vsub.f32 0.0, %v1667
      %v1684 = vsub.f32 0.0, %v1668
      %v1685 = vsub.f32 0.0, %v1669
      %v1686 = vmul.f32 %v1670, 1.442695
      %v1687 = vpow.pop %v1686
      %v1688 = vmul.f32 %v1671, 1.442695
      %v1689 = vpow.pop %v1688
      %v1690 = vmul.f32 %v1672, 1.442695
      %v1691 = vpow.pop %v1690
      %v1692 = vmul.f32 %v1673, 1.442695
      %v1693 = vpow.pop %v1692
      %v1694 = vmul.f32 %v1674, 1.442695
      %v1695 = vpow.pop %v1694
      %v1696 = vmul.f32 %v1675, 1.442695
      %v1697 = vpow.pop %v1696
      %v1698 = vmul.f32 %v1676, 1.442695
      %v1699 = vpow.pop %v1698
      %v1700 = vmul.f32 %v1677, 1.442695
      %v1701 = vpow.pop %v1700
      %v1702 = vmul.f32 %v1678, 1.442695
      %v1703 = vpow.pop %v1702
      %v1704 = vmul.f32 %v1679, 1.442695
      %v1705 = vpow.pop %v1704
      %v1706 = vmul.f32 %v1680, 1.442695
      %v1707 = vpow.pop %v1706
      %v1708 = vmul.f32 %v1681, 1.442695
      %v1709 = vpow.pop %v1708
      %v1710 = vmul.f32 %v1682, 1.442695
      %v1711 = vpow.pop %v1710
      %v1712 = vmul.f32 %v1683, 1.442695
      %v1713 = vpow.pop %v1712
      %v1714 = vmul.f32 %v1684, 1.442695
      %v1715 = vpow.pop %v1714
      %v1716 = vmul.f32 %v1685, 1.442695
      %v1717 = vpow.pop %v1716
      %v1718 = vadd.f32 %v1687, 1.0
      %v1719 = vadd.f32 %v1689, 1.0
      %v1720 = vadd.f32 %v1691, 1.0
      %v1721 = vadd.f32 %v1693, 1.0
      %v1722 = vadd.f32 %v1695, 1.0
      %v1723 = vadd.f32 %v1697, 1.0
      %v1724 = vadd.f32 %v1699, 1.0
      %v1725 = vadd.f32 %v1701, 1.0
      %v1726 = vadd.f32 %v1703, 1.0
      %v1727 = vadd.f32 %v1705, 1.0
      %v1728 = vadd.f32 %v1707, 1.0
      %v1729 = vadd.f32 %v1709, 1.0
      %v1730 = vadd.f32 %v1711, 1.0
      %v1731 = vadd.f32 %v1713, 1.0
      %v1732 = vadd.f32 %v1715, 1.0
      %v1733 = vadd.f32 %v1717, 1.0
      %v1734 = vrcp.pop %v1718
      %v1735 = vrcp.pop %v1719
      %v1736 = vrcp.pop %v1720
      %v1737 = vrcp.pop %v1721
      %v1738 = vrcp.pop %v1722
      %v1739 = vrcp.pop %v1723
      %v1740 = vrcp.pop %v1724
      %v1741 = vrcp.pop %v1725
      %v1742 = vrcp.pop %v1726
      %v1743 = vrcp.pop %v1727
      %v1744 = vrcp.pop %v1728
      %v1745 = vrcp.pop %v1729
      %v1746 = vrcp.pop %v1730
      %v1747 = vrcp.pop %v1731
      %v1748 = vrcp.pop %v1732
      %v1749 = vrcp.pop %v1733
      %v1750 = vmul.f32 %v1734, %v1053
      %v1751 = vmul.f32 %v1735, %v1054
      %v1752 = vmul.f32 %v1736, %v1055
      %v1753 = vmul.f32 %v1737, %v1056
      %v1754 = vmul.f32 %v1738, %v1057
      %v1755 = vmul.f32 %v1739, %v1058
      %v1756 = vmul.f32 %v1740, %v1059
      %v1757 = vmul.f32 %v1741, %v1060
      %v1758 = vmul.f32 %v1742, %v1061
      %v1759 = vmul.f32 %v1743, %v1062
      %v1760 = vmul.f32 %v1744, %v1063
      %v1761 = vmul.f32 %v1745, %v1064
      %v1762 = vmul.f32 %v1746, %v1065
      %v1763 = vmul.f32 %v1747, %v1066
      %v1764 = vmul.f32 %v1748, %v1067
      %v1765 = vmul.f32 %v1749, %v1068
      %v1766 = vadd.f32 %v342, %v1750
      %v1767 = vadd.f32 %v343, %v1751
      %v1768 = vadd.f32 %v344, %v1752
      %v1769 = vadd.f32 %v345, %v1753
      %v1770 = vadd.f32 %v346, %v1754
      %v1771 = vadd.f32 %v347, %v1755
      %v1772 = vadd.f32 %v348, %v1756
      %v1773 = vadd.f32 %v349, %v1757
      %v1774 = vadd.f32 %v350, %v1758
      %v1775 = vadd.f32 %v351, %v1759
      %v1776 = vadd.f32 %v352, %v1760
      %v1777 = vadd.f32 %v353, %v1761
      %v1778 = vadd.f32 %v354, %v1762
      %v1779 = vadd.f32 %v355, %v1763
      %v1780 = vadd.f32 %v356, %v1764
      %v1781 = vadd.f32 %v357, %v1765
      %1782 = vst [vmem:[%s325] sm:$0xff] %v1766
      %1783 = vst [vmem:[%s325 + $0x8] sm:$0xff] %v1767
      %1784 = vst [vmem:[%s325 + $0x10] sm:$0xff] %v1768
      %1785 = vst [vmem:[%s325 + $0x18] sm:$0xff] %v1769
      %1786 = vst [vmem:[%s325 + $0x20] sm:$0xff] %v1770
      %1787 = vst [vmem:[%s325 + $0x28] sm:$0xff] %v1771
      %1788 = vst [vmem:[%s325 + $0x30] sm:$0xff] %v1772
      %1789 = vst [vmem:[%s325 + $0x38] sm:$0xff] %v1773
      %1790 = vst [vmem:[%s325 + $0x40] sm:$0xff] %v1774
      %1791 = vst [vmem:[%s325 + $0x48] sm:$0xff] %v1775
      %1792 = vst [vmem:[%s325 + $0x50] sm:$0xff] %v1776
      %1793 = vst [vmem:[%s325 + $0x58] sm:$0xff] %v1777
      %1794 = vst [vmem:[%s325 + $0x60] sm:$0xff] %v1778
      %1795 = vst [vmem:[%s325 + $0x68] sm:$0xff] %v1779
      %1796 = vst [vmem:[%s325 + $0x70] sm:$0xff] %v1780
      %1797 = vst [vmem:[%s325 + $0x78] sm:$0xff] %v1781
      %p1798 = scmp.lt.s32.totalorder %s19, 1
      %s1799 = scalar_select %p1798, %s19, 1
      %s1800 = smul.addr %s1799, 16
      %s1801 = smul.addr %s1800, 8
      %s1802 = scalar_lea.vmem %s8, %s1801
      // Predicated region
      $region53: #{iaff_forward.1} parent=51 // pred_check
        %p1803 = pneg %p215
      $region54: #{iaff_forward.1} parent=51 // pred_check_branch
        %1805 = sbr.rel (%p1803) target = $region56
      $region55: #{iaff_forward.1} parent=51 // pred_region
        _
      $region56: #{iaff_forward.1} parent=51 // pred_fallthru
        _
    $region52: #{iaff_forward.1} parent=5 // pred_fallthru
      _
    %p1806 = scmp.le.s32.totalorder 2, %s14
    // Predicated region
    $region57: #{iaff_forward.1} parent=5 // pred_check
      %p1807 = pneg %p1806
    $region58: #{iaff_forward.1} parent=5 // pred_check_branch
      %1809 = sbr.rel (%p1807) target = $region60
    $region59: #{iaff_forward.1} parent=5 // pred_region
      %s1810 = ssub.s32 %s14, 2
      // Predicated region
      $region61: #{iaff_forward.1} parent=59 // pred_check
        %p1811 = pneg %p221
      $region62: #{iaff_forward.1} parent=59 // pred_check_branch
        %1813 = sbr.rel (%p1811) target = $region64
      $region63: #{iaff_forward.1} parent=59 // pred_region
        %p1814 = scmp.lt.s32.totalorder %s20, 1
        %s1815 = scalar_select %p1814, %s20, 1
        %s1816 = smul.addr %s1815, 16
        %s1817 = smul.addr %s1816, 8
        %s1818 = scalar_lea.vmem %s8, %s1817
      $region64: #{iaff_forward.1} parent=59 // pred_fallthru
        _
    $region60: #{iaff_forward.1} parent=5 // pred_fallthru
      _
  $region6: #{iaff_forward.1} parent=0 // loop_footer
    %s18 = sadd.s32 1, %s14
  $region7: #{iaff_forward.1} parent=0 // loop_footer_branch
    %13 = sbr.rel target = $region3
  $region8: #{iaff_forward.1} parent=0 // loop_exit
    _

</llo_original>
